<compile_context>
chip_gen: v7x
topology: tpu7x:2x2x1
jax: 0.10.0
libtpu: 0.0.40
codegen_flags: <defaults>
</compile_context>

<pallas_src>
import jax
import jax.numpy as jnp
from jax import lax
from jax.experimental import pallas as pl
from jax.experimental.pallas import tpu as pltpu


# ---------------------------------------------------------------------------
# Kernel 1: polyphase (upsample x2 + 3x3 conv) + bias + BN partial statistics.
# One batch element per grid step.  Channel-major / lane-dense layout.
#
#   x_ref   : (1, Cin, H, W)     original-resolution input, PyTorch NCHW, unpadded
#   w_ref   : (4*Cout, 9*Cin)    combined polyphase weights (zeros on unused taps)
#   b_ref   : (4*Cout, 1)        bias tiled over the 4 phases
#   o_ref   : (1, 4*Cout, H*W)   row = (2a+b)*Cout + c, col = i*W + j
#                                == conv output y[2i+a, 2j+b, c]
#   stat_ref: (1, 4*Cout, 2)     [sum, sum-of-squares] over the H*W pixels
# ---------------------------------------------------------------------------
def upconv_conv_kernel(x_ref, w_ref, b_ref, o_ref, stat_ref):
    Cin, H, W = x_ref.shape[1], x_ref.shape[2], x_ref.shape[3]
    HW = H * W

    x = x_ref[0]  # (Cin, H, W)

    # zero-pad by 1 pixel in VMEM (padded input never exists in HBM)
    zrow = jnp.zeros((Cin, 1, W), x.dtype)
    xv = jnp.concatenate([zrow, x, zrow], axis=1)        # (Cin, H+2, W)
    zcol = jnp.zeros((Cin, H + 2, 1), x.dtype)
    xp = jnp.concatenate([zcol, xv, zcol], axis=2)       # (Cin, H+2, W+2)

    # im2col over the ORIGINAL resolution: 9 shifted taps -> (9*Cin, H*W)
    taps = []
    for dr in range(3):
        for dc in range(3):
            taps.append(xp[:, dr:dr + H, dc:dc + W].reshape(Cin, HW))
    patch = jnp.concatenate(taps, axis=0)                # (9*Cin, H*W)

    # single MXU matmul producing all 4 output phases at once, lane dim = H*W
    acc = jnp.dot(w_ref[...], patch, preferred_element_type=jnp.float32)  # (4*Cout, HW)
    acc = acc + b_ref[...]                               # + (4*Cout, 1) column broadcast

    o_ref[0] = acc.astype(o_ref.dtype)

    # per-(phase, channel) partial sums for batch-norm statistics (no extra HBM pass later)
    ssum = jnp.sum(acc, axis=1, keepdims=True)           # (4*Cout, 1)
    ssq = jnp.sum(acc * acc, axis=1, keepdims=True)      # (4*Cout, 1)
    stat_ref[0] = jnp.concatenate([ssum, ssq], axis=1)   # (4*Cout, 2)


# ---------------------------------------------------------------------------
# Kernel 2: fused BN-affine + ReLU on the lane-dense conv layout.
# Output is aliased onto the conv_out buffer.
# ---------------------------------------------------------------------------
def bn_relu_kernel(y_ref, scale_ref, shift_ref, o_ref):
    y = y_ref[0]  # (4*Cout, H*W)
    o_ref[0] = jnp.maximum(y * scale_ref[...] + shift_ref[...], 0.0).astype(o_ref.dtype)


# ---------------------------------------------------------------------------
# Weight preparation: fold nearest-x2-upsample into the 3x3 conv weights.
# ---------------------------------------------------------------------------
def _polyphase_weights(w_oihw):
    """OIHW 3x3 conv weights -> (9*Cin, 4*Cout) combined polyphase matrix.

    For output phase (a, b) (output pixel (2i+a, 2j+b)), upsample-x2 + 3x3/pad-1 conv is a
    2x2 conv of the original input (padded by 1) whose taps sit at rows {a, a+1} /
    cols {b, b+1} of the 3x3 neighbourhood and whose weights are sums of the 3x3 weights.
    """
    Cout, Cin = w_oihw.shape[0], w_oihw.shape[1]
    w = jnp.transpose(w_oihw, (2, 3, 1, 0))  # (3, 3, Cin, Cout) HWIO

    def group(arr, phase, axis):
        # collapse the 3 original taps along `axis` into the 2 taps used by this phase
        if phase == 0:
            g0 = lax.slice_in_dim(arr, 0, 1, axis=axis)
            g1 = lax.slice_in_dim(arr, 1, 3, axis=axis).sum(axis=axis, keepdims=True)
        else:
            g0 = lax.slice_in_dim(arr, 0, 2, axis=axis).sum(axis=axis, keepdims=True)
            g1 = lax.slice_in_dim(arr, 2, 3, axis=axis)
        return jnp.concatenate([g0, g1], axis=axis)  # size 2 along `axis`

    blocks = []
    for a in range(2):
        for b in range(2):
            w_ab = group(group(w, a, 0), b, 1)                            # (2, 2, Cin, Cout)
            # place the 2x2 block at rows [a, a+1], cols [b, b+1] of the 3x3 tap grid
            w_ab = jnp.pad(w_ab, ((a, 1 - a), (b, 1 - b), (0, 0), (0, 0)))  # (3, 3, Cin, Cout)
            blocks.append(w_ab)
    w_comb = jnp.concatenate(blocks, axis=-1)                              # (3, 3, Cin, 4*Cout)
    return w_comb.reshape(9 * Cin, 4 * Cout)


# ---------------------------------------------------------------------------
# Wrapper: up_conv forward pass (matches the PyTorch module, NCHW in / NCHW out)
# ---------------------------------------------------------------------------
def up_conv_forward(x_nchw, w_oihw, bias, gamma, beta, eps=1e-5):
    """x_nchw: (N, Cin, H, W) f32 -> (N, Cout, 2H, 2W) f32."""
    N, Cin, H, W = x_nchw.shape
    Cout = w_oihw.shape[0]
    H2, W2 = 2 * H, 2 * W
    HW, C4 = H * W, 4 * Cout

    w_t = _polyphase_weights(w_oihw).T           # (4*Cout, 9*Cin)
    b_col = jnp.tile(bias, 4).reshape(C4, 1)     # (4*Cout, 1), phase-tiled

    # --- Pallas: polyphase conv + bias + BN partial sums (NCHW input, no XLA pre-pass) ----
    conv_out, stats = pl.pallas_call(
        upconv_conv_kernel,
        out_shape=(jax.ShapeDtypeStruct((N, C4, HW), jnp.float32),
                   jax.ShapeDtypeStruct((N, C4, 2), jnp.float32)),
        grid_spec=pltpu.PrefetchScalarGridSpec(
            num_scalar_prefetch=0,
            grid=(N,),
            in_specs=[
                pl.BlockSpec((1, Cin, H, W), lambda n: (n, 0, 0, 0)),
                pl.BlockSpec((C4, 9 * Cin), lambda n: (0, 0)),
                pl.BlockSpec((C4, 1), lambda n: (0, 0)),
            ],
            out_specs=(
                pl.BlockSpec((1, C4, HW), lambda n: (n, 0, 0)),
                pl.BlockSpec((1, C4, 2), lambda n: (n, 0, 0)),
            ),
        ),
        compiler_params=pltpu.CompilerParams(dimension_semantics=("parallel",)),
    )(x_nchw, w_t, b_col)
    # TODO(synk): for production decoder shapes on v7x (64 MiB VMEM), add a row-tiled grid
    # axis (im2col patch of 9*Cin x H*W won't fit whole-image) instead of per-image blocks.

    # --- BN scale/shift from the kernel-emitted partial sums (tiny, no conv_out re-read) ---
    count = jnp.float32(N * H2 * W2)
    sums = jnp.sum(stats[:, :, 0].reshape(N, 4, Cout), axis=(0, 1))   # (Cout,)
    sqs = jnp.sum(stats[:, :, 1].reshape(N, 4, Cout), axis=(0, 1))    # (Cout,)
    mean = sums / count
    var = jnp.maximum(sqs / count - mean * mean, 0.0)  # biased var (PyTorch train-mode BN)
    scale = gamma * lax.rsqrt(var + eps)
    shift = beta - mean * scale
    scale_c = jnp.tile(scale, 4).reshape(C4, 1)
    shift_c = jnp.tile(shift, 4).reshape(C4, 1)

    # --- Pallas: fused BN-affine + ReLU, output aliased onto conv_out ----------------------
    bn_out = pl.pallas_call(
        bn_relu_kernel,
        out_shape=jax.ShapeDtypeStruct((N, C4, HW), jnp.float32),
        grid_spec=pltpu.PrefetchScalarGridSpec(
            num_scalar_prefetch=0,
            grid=(N,),
            in_specs=[
                pl.BlockSpec((1, C4, HW), lambda n: (n, 0, 0)),
                pl.BlockSpec((C4, 1), lambda n: (0, 0)),
                pl.BlockSpec((C4, 1), lambda n: (0, 0)),
            ],
            out_specs=pl.BlockSpec((1, C4, HW), lambda n: (n, 0, 0)),
        ),
        compiler_params=pltpu.CompilerParams(dimension_semantics=("parallel",)),
        input_output_aliases={0: 0},  # reuse conv_out's HBM buffer
    )(conv_out, scale_c, shift_c)

    # --- phase interleave + layout back to PyTorch NCHW: one fused XLA reshape/transpose ---
    # TODO(synk): fold this interleave into the BN kernel once the 5-D in-kernel relayout
    # (stride-2 lane/sublane interleave) is worth the risk; kept in XLA for robustness.
    out = bn_out.reshape(N, 2, 2, Cout, H, W)          # (n, a, b, c, i, j)
    out = jnp.transpose(out, (0, 3, 4, 1, 5, 2))       # (n, c, i, a, j, b)
    return out.reshape(N, Cout, H2, W2)


# ---------------------------------------------------------------------------
# Pure-JAX reference for sanity checking
# ---------------------------------------------------------------------------
def up_conv_reference(x_nchw, w_oihw, bias, gamma, beta, eps=1e-5):
    x_nhwc = jnp.transpose(x_nchw, (0, 2, 3, 1))
    x_up = jnp.repeat(jnp.repeat(x_nhwc, 2, axis=1), 2, axis=2)
    w_hwio = jnp.transpose(w_oihw, (2, 3, 1, 0))
    y = lax.conv_general_dilated(
        x_up, w_hwio, window_strides=(1, 1), padding="SAME",
        dimension_numbers=("NHWC", "HWIO", "NHWC"),
    ) + bias[None, None, None, :]
    mean = jnp.mean(y, axis=(0, 1, 2))
    var = jnp.var(y, axis=(0, 1, 2))
    y = (y - mean) * lax.rsqrt(var + eps) * gamma + beta
    y = jnp.maximum(y, 0.0)
    return jnp.transpose(y, (0, 3, 1, 2))


if __name__ == "__main__":
    key = jax.random.PRNGKey(0)
    k_x, k_w, k_b, k_g, k_e = jax.random.split(key, 5)

    N, Cin, H, W = 2, 4, 16, 16
    Cout = 8

    x = jax.random.normal(k_x, (N, Cin, H, W), dtype=jnp.float32)
    # synthetic parameters, shapes per nn.Conv2d(Cin, Cout, 3) / nn.BatchNorm2d(Cout)
    w = 0.1 * jax.random.normal(k_w, (Cout, Cin, 3, 3), dtype=jnp.float32)
    b = 0.1 * jax.random.normal(k_b, (Cout,), dtype=jnp.float32)
    gamma = 1.0 + 0.1 * jax.random.normal(k_g, (Cout,), dtype=jnp.float32)
    beta = 0.1 * jax.random.normal(k_e, (Cout,), dtype=jnp.float32)

    fwd = jax.jit(up_conv_forward)
    out = jax.block_until_ready(fwd(x, w, b, gamma, beta))
    ref = jax.block_until_ready(up_conv_reference(x, w, b, gamma, beta))

    assert out.shape == (N, Cout, 2 * H, 2 * W), out.shape
    assert jnp.allclose(out, ref, rtol=3e-4, atol=3e-4), float(jnp.max(jnp.abs(out - ref)))

    print("KERNEL_OK")
</pallas_src>

<mosaic_0001>
module attributes {stable_mosaic.version = 11 : i64} {
  func.func @upconv_conv_kernel(%arg0: i32, %arg1: memref<1x4x16x16xf32, #tpu.memory_space<vmem>>, %arg2: memref<32x36xf32, #tpu.memory_space<vmem>>, %arg3: memref<32x1xf32, #tpu.memory_space<vmem>>, %arg4: memref<1x32x256xf32, #tpu.memory_space<vmem>>, %arg5: memref<1x32x2xf32, #tpu.memory_space<vmem>>) attributes {dimension_semantics = [#tpu.dimension_semantics<parallel>], iteration_bounds = array<i64: 2>, scalar_prefetch = 0 : i64, scratch_operands = 0 : i64, tpu.core_type = #tpu.core_type<tc>, window_params = [{transform_indices = @transform_0, window_bounds = array<i64: 1, 4, 16, 16>}, {pipeline_mode = #tpu.pipeline_mode<synchronous>, transform_indices = @transform_1, window_bounds = array<i64: 32, 36>}, {pipeline_mode = #tpu.pipeline_mode<synchronous>, transform_indices = @transform_2, window_bounds = array<i64: 32, 1>}, {transform_indices = @transform_3, window_bounds = array<i64: 1, 32, 256>}, {transform_indices = @transform_4, window_bounds = array<i64: 1, 32, 2>}]} {
    %c0 = arith.constant 0 : index
    %c0_0 = arith.constant 0 : index
    %c0_1 = arith.constant 0 : index
    %c0_2 = arith.constant 0 : index
    %0 = vector.load %arg1[%c0, %c0_0, %c0_1, %c0_2] : memref<1x4x16x16xf32, #tpu.memory_space<vmem>>, vector<1x4x16x16xf32>
    %1 = vector.shape_cast %0 : vector<1x4x16x16xf32> to vector<4x16x16xf32>
    %cst = arith.constant 0.000000e+00 : f32
    %2 = vector.broadcast %cst : f32 to vector<4x1x16xf32>
    %3 = tpu.concatenate %2, %1, %2 in 1 : vector<4x1x16xf32>, vector<4x16x16xf32>, vector<4x1x16xf32> -> vector<4x18x16xf32>
    %cst_3 = arith.constant 0.000000e+00 : f32
    %4 = vector.broadcast %cst_3 : f32 to vector<4x18x1xf32>
    %5 = tpu.concatenate %4, %3, %4 in 2 : vector<4x18x1xf32>, vector<4x18x16xf32>, vector<4x18x1xf32> -> vector<4x18x18xf32>
    %6 = vector.extract_strided_slice %5 {offsets = [0, 0, 0], sizes = [4, 16, 16], strides = [1, 1, 1]} : vector<4x18x18xf32> to vector<4x16x16xf32>
    %7 = vector.shape_cast %6 : vector<4x16x16xf32> to vector<4x256xf32>
    %8 = vector.extract_strided_slice %5 {offsets = [0, 0, 1], sizes = [4, 16, 16], strides = [1, 1, 1]} : vector<4x18x18xf32> to vector<4x16x16xf32>
    %9 = vector.shape_cast %8 : vector<4x16x16xf32> to vector<4x256xf32>
    %10 = vector.extract_strided_slice %5 {offsets = [0, 0, 2], sizes = [4, 16, 16], strides = [1, 1, 1]} : vector<4x18x18xf32> to vector<4x16x16xf32>
    %11 = vector.shape_cast %10 : vector<4x16x16xf32> to vector<4x256xf32>
    %12 = vector.extract_strided_slice %5 {offsets = [0, 1, 0], sizes = [4, 16, 16], strides = [1, 1, 1]} : vector<4x18x18xf32> to vector<4x16x16xf32>
    %13 = vector.shape_cast %12 : vector<4x16x16xf32> to vector<4x256xf32>
    %14 = vector.extract_strided_slice %5 {offsets = [0, 1, 1], sizes = [4, 16, 16], strides = [1, 1, 1]} : vector<4x18x18xf32> to vector<4x16x16xf32>
    %15 = vector.shape_cast %14 : vector<4x16x16xf32> to vector<4x256xf32>
    %16 = vector.extract_strided_slice %5 {offsets = [0, 1, 2], sizes = [4, 16, 16], strides = [1, 1, 1]} : vector<4x18x18xf32> to vector<4x16x16xf32>
    %17 = vector.shape_cast %16 : vector<4x16x16xf32> to vector<4x256xf32>
    %18 = vector.extract_strided_slice %5 {offsets = [0, 2, 0], sizes = [4, 16, 16], strides = [1, 1, 1]} : vector<4x18x18xf32> to vector<4x16x16xf32>
    %19 = vector.shape_cast %18 : vector<4x16x16xf32> to vector<4x256xf32>
    %20 = vector.extract_strided_slice %5 {offsets = [0, 2, 1], sizes = [4, 16, 16], strides = [1, 1, 1]} : vector<4x18x18xf32> to vector<4x16x16xf32>
    %21 = vector.shape_cast %20 : vector<4x16x16xf32> to vector<4x256xf32>
    %22 = vector.extract_strided_slice %5 {offsets = [0, 2, 2], sizes = [4, 16, 16], strides = [1, 1, 1]} : vector<4x18x18xf32> to vector<4x16x16xf32>
    %23 = vector.shape_cast %22 : vector<4x16x16xf32> to vector<4x256xf32>
    %24 = tpu.concatenate %7, %9, %11, %13, %15, %17, %19, %21, %23 in 0 : vector<4x256xf32>, vector<4x256xf32>, vector<4x256xf32>, vector<4x256xf32>, vector<4x256xf32>, vector<4x256xf32>, vector<4x256xf32>, vector<4x256xf32>, vector<4x256xf32> -> vector<36x256xf32>
    %c0_4 = arith.constant 0 : index
    %c0_5 = arith.constant 0 : index
    %25 = vector.load %arg2[%c0_4, %c0_5] : memref<32x36xf32, #tpu.memory_space<vmem>>, vector<32x36xf32>
    %cst_6 = arith.constant dense<0.000000e+00> : vector<32x256xf32>
    %26 = tpu.matmul %25, %24, %cst_6 {dimension_numbers = #tpu.dot_dimension_numbers<[1], [0], [0], [1], [0, 0, 1, 1], [], []>} : vector<32x36xf32>, vector<36x256xf32>, vector<32x256xf32> -> vector<32x256xf32>
    %c0_7 = arith.constant 0 : index
    %c0_8 = arith.constant 0 : index
    %27 = vector.load %arg3[%c0_7, %c0_8] : memref<32x1xf32, #tpu.memory_space<vmem>>, vector<32x1xf32>
    %28 = vector.broadcast %27 : vector<32x1xf32> to vector<32x256xf32>
    %29 = arith.addf %26, %28 : vector<32x256xf32>
    %c0_9 = arith.constant 0 : index
    %c0_10 = arith.constant 0 : index
    %c0_11 = arith.constant 0 : index
    %30 = vector.load %arg4[%c0_9, %c0_10, %c0_11] : memref<1x32x256xf32, #tpu.memory_space<vmem>>, vector<1x32x256xf32>
    %31 = vector.shape_cast %30 : vector<1x32x256xf32> to vector<32x256xf32>
    %32 = vector.shape_cast %29 : vector<32x256xf32> to vector<1x32x256xf32>
    tpu.vector_store %arg4[%c0_9, %c0_10, %c0_11], %32 {strides = array<i32>} : memref<1x32x256xf32, #tpu.memory_space<vmem>>, vector<1x32x256xf32>,
    %cst_12 = arith.constant dense<0.000000e+00> : vector<32xf32>
    %33 = vector.multi_reduction <add>, %29, %cst_12 [1] : vector<32x256xf32> to vector<32xf32>
    %34 = vector.shape_cast %33 : vector<32xf32> to vector<32x1xf32>
    %35 = arith.mulf %29, %29 : vector<32x256xf32>
    %cst_13 = arith.constant dense<0.000000e+00> : vector<32xf32>
    %36 = vector.multi_reduction <add>, %35, %cst_13 [1] : vector<32x256xf32> to vector<32xf32>
    %37 = vector.shape_cast %36 : vector<32xf32> to vector<32x1xf32>
    %38 = tpu.concatenate %34, %37 in 1 : vector<32x1xf32>, vector<32x1xf32> -> vector<32x2xf32>
    %c0_14 = arith.constant 0 : index
    %c0_15 = arith.constant 0 : index
    %c0_16 = arith.constant 0 : index
    %39 = vector.load %arg5[%c0_14, %c0_15, %c0_16] : memref<1x32x2xf32, #tpu.memory_space<vmem>>, vector<1x32x2xf32>
    %40 = vector.shape_cast %39 : vector<1x32x2xf32> to vector<32x2xf32>
    %41 = vector.shape_cast %38 : vector<32x2xf32> to vector<1x32x2xf32>
    tpu.vector_store %arg5[%c0_14, %c0_15, %c0_16], %41 {strides = array<i32>} : memref<1x32x2xf32, #tpu.memory_space<vmem>>, vector<1x32x2xf32>,
    return
  }
  func.func @transform_0(%arg0: i32) -> (i32, i32, i32, i32) {
    %c0_i32 = arith.constant 0 : i32
    %c0_i32_0 = arith.constant 0 : i32
    %c0_i32_1 = arith.constant 0 : i32
    %c0_i32_2 = arith.constant 0 : i32
    return %arg0, %c0_i32, %c0_i32_0, %c0_i32_1 : i32, i32, i32, i32
  }
  func.func @transform_1(%arg0: i32) -> (i32, i32) {
    %c0_i32 = arith.constant 0 : i32
    %c0_i32_0 = arith.constant 0 : i32
    %c0_i32_1 = arith.constant 0 : i32
    return %c0_i32, %c0_i32_0 : i32, i32
  }
  func.func @transform_2(%arg0: i32) -> (i32, i32) {
    %c0_i32 = arith.constant 0 : i32
    %c0_i32_0 = arith.constant 0 : i32
    %c0_i32_1 = arith.constant 0 : i32
    return %c0_i32, %c0_i32_0 : i32, i32
  }
  func.func @transform_3(%arg0: i32) -> (i32, i32, i32) {
    %c0_i32 = arith.constant 0 : i32
    %c0_i32_0 = arith.constant 0 : i32
    %c0_i32_1 = arith.constant 0 : i32
    return %arg0, %c0_i32, %c0_i32_0 : i32, i32, i32
  }
  func.func @transform_4(%arg0: i32) -> (i32, i32, i32) {
    %c0_i32 = arith.constant 0 : i32
    %c0_i32_0 = arith.constant 0 : i32
    %c0_i32_1 = arith.constant 0 : i32
    return %arg0, %c0_i32, %c0_i32_0 : i32, i32, i32
  }
}

module attributes {stable_mosaic.version = 11 : i64} {
  func.func @bn_relu_kernel(%arg0: i32, %arg1: memref<1x32x256xf32, #tpu.memory_space<vmem>>, %arg2: memref<32x1xf32, #tpu.memory_space<vmem>>, %arg3: memref<32x1xf32, #tpu.memory_space<vmem>>, %arg4: memref<1x32x256xf32, #tpu.memory_space<vmem>>) attributes {dimension_semantics = [#tpu.dimension_semantics<parallel>], iteration_bounds = array<i64: 2>, scalar_prefetch = 0 : i64, scratch_operands = 0 : i64, tpu.core_type = #tpu.core_type<tc>, window_params = [{transform_indices = @transform_0, window_bounds = array<i64: 1, 32, 256>}, {pipeline_mode = #tpu.pipeline_mode<synchronous>, transform_indices = @transform_1, window_bounds = array<i64: 32, 1>}, {pipeline_mode = #tpu.pipeline_mode<synchronous>, transform_indices = @transform_2, window_bounds = array<i64: 32, 1>}, {transform_indices = @transform_3, window_bounds = array<i64: 1, 32, 256>}]} {
    %c0 = arith.constant 0 : index
    %c0_0 = arith.constant 0 : index
    %c0_1 = arith.constant 0 : index
    %0 = vector.load %arg1[%c0, %c0_0, %c0_1] : memref<1x32x256xf32, #tpu.memory_space<vmem>>, vector<1x32x256xf32>
    %1 = vector.shape_cast %0 : vector<1x32x256xf32> to vector<32x256xf32>
    %c0_2 = arith.constant 0 : index
    %c0_3 = arith.constant 0 : index
    %2 = vector.load %arg2[%c0_2, %c0_3] : memref<32x1xf32, #tpu.memory_space<vmem>>, vector<32x1xf32>
    %3 = vector.broadcast %2 : vector<32x1xf32> to vector<32x256xf32>
    %4 = arith.mulf %1, %3 : vector<32x256xf32>
    %c0_4 = arith.constant 0 : index
    %c0_5 = arith.constant 0 : index
    %5 = vector.load %arg3[%c0_4, %c0_5] : memref<32x1xf32, #tpu.memory_space<vmem>>, vector<32x1xf32>
    %6 = vector.broadcast %5 : vector<32x1xf32> to vector<32x256xf32>
    %7 = arith.addf %4, %6 : vector<32x256xf32>
    %cst = arith.constant 0.000000e+00 : f32
    %8 = vector.broadcast %cst : f32 to vector<32x256xf32>
    %9 = arith.maximumf %7, %8 : vector<32x256xf32>
    %c0_6 = arith.constant 0 : index
    %c0_7 = arith.constant 0 : index
    %c0_8 = arith.constant 0 : index
    %10 = vector.load %arg4[%c0_6, %c0_7, %c0_8] : memref<1x32x256xf32, #tpu.memory_space<vmem>>, vector<1x32x256xf32>
    %11 = vector.shape_cast %10 : vector<1x32x256xf32> to vector<32x256xf32>
    %12 = vector.shape_cast %9 : vector<32x256xf32> to vector<1x32x256xf32>
    tpu.vector_store %arg4[%c0_6, %c0_7, %c0_8], %12 {strides = array<i32>} : memref<1x32x256xf32, #tpu.memory_space<vmem>>, vector<1x32x256xf32>,
    return
  }
  func.func @transform_0(%arg0: i32) -> (i32, i32, i32) {
    %c0_i32 = arith.constant 0 : i32
    %c0_i32_0 = arith.constant 0 : i32
    %c0_i32_1 = arith.constant 0 : i32
    return %arg0, %c0_i32, %c0_i32_0 : i32, i32, i32
  }
  func.func @transform_1(%arg0: i32) -> (i32, i32) {
    %c0_i32 = arith.constant 0 : i32
    %c0_i32_0 = arith.constant 0 : i32
    %c0_i32_1 = arith.constant 0 : i32
    return %c0_i32, %c0_i32_0 : i32, i32
  }
  func.func @transform_2(%arg0: i32) -> (i32, i32) {
    %c0_i32 = arith.constant 0 : i32
    %c0_i32_0 = arith.constant 0 : i32
    %c0_i32_1 = arith.constant 0 : i32
    return %c0_i32, %c0_i32_0 : i32, i32
  }
  func.func @transform_3(%arg0: i32) -> (i32, i32, i32) {
    %c0_i32 = arith.constant 0 : i32
    %c0_i32_0 = arith.constant 0 : i32
    %c0_i32_1 = arith.constant 0 : i32
    return %arg0, %c0_i32, %c0_i32_0 : i32, i32, i32
  }
}

</mosaic_0001>

<llo_original>
// kernel: tile.18
$region0: #{tile.18}
  #allocation0 [shape = 's32[1]{0}', space=sflag, size = 0x4, scoped, tag = 'scoped memory for tile.18']
  %s0 = inlined_call_operand.vmem [shape: f32[8], index: 0, kind: input, shape index: {}]
  %s1 = inlined_call_operand.vmem [shape: f32[4,8], index: 1, kind: output, shape index: {}]
  // Predicated region
  $region2: #{tile.18} parent=0 // pred_check
    _
  $region3: #{tile.18} parent=0 // pred_check_branch
    %3 = sbr.rel (0) target = $region5
  $region4: #{tile.18} parent=0 // pred_region
    _
  $region5: #{tile.18} parent=0 // pred_fallthru
    _
  %v4 = vld [vmem:[%s0] ss:$0 sm:$0xff]
  %5 = vst [vmem:[%s1] sm:$0xf] %v4

// kernel: tile.0
$region0: #{tile.0}
  %s0 = inlined_call_operand.vmem [shape: f32[4,8], index: 0, kind: input, shape index: {}]
  %s1 = inlined_call_operand.vmem [shape: f32[32,1], index: 1, kind: output, shape index: {}]
  $region1: #{tile.0} parent=0
    #allocation0 [shape = 'u8[4096]{0}', space=vmem, size = 0x1000, scoped, tag = 'scoped mem for input reshape']
    %s3 = sshllo.u32 0, 4
    %v4 = vld [vmem:[%s0] sm:%s3]
    %5 = vst [vmem:[#allocation0] sm:%s3] %v4
    %v6 = vld [vmem:[#allocation0] sm:$0xf]
    %vm7 = vcmask 7168
    %8 = vst.msk [vmem:[%s1] ss:$8 sm:$0xf] %vm7, %v6
    %v9 = vld [vmem:[#allocation0] sm:$0xf]
    %10 = vrot.lane.b32.xlu0 %v9, 127
    %v11 = vpop.permute.xlu0 %10
    %vm12 = vcmask 7168
    %s13 = scalar_lea.vmem %s1, 1
    %14 = vst.msk [vmem:[%s13] ss:$8 sm:$0xf] %vm12, %v11
    %v15 = vld [vmem:[#allocation0] sm:$0xf]
    %16 = vrot.lane.b32.xlu0 %v15, 126
    %v17 = vpop.permute.xlu0 %16
    %vm18 = vcmask 7168
    %s19 = scalar_lea.vmem %s1, 2
    %20 = vst.msk [vmem:[%s19] ss:$8 sm:$0xf] %vm18, %v17
    %v21 = vld [vmem:[#allocation0] sm:$0xf]
    %22 = vrot.lane.b32.xlu0 %v21, 125
    %v23 = vpop.permute.xlu0 %22
    %vm24 = vcmask 7168
    %s25 = scalar_lea.vmem %s1, 3
    %26 = vst.msk [vmem:[%s25] ss:$8 sm:$0xf] %vm24, %v23
    %v27 = vld [vmem:[#allocation0] sm:$0xf]
    %28 = vrot.lane.b32.xlu0 %v27, 124
    %v29 = vpop.permute.xlu0 %28
    %vm30 = vcmask 7168
    %s31 = scalar_lea.vmem %s1, 4
    %32 = vst.msk [vmem:[%s31] ss:$8 sm:$0xf] %vm30, %v29
    %v33 = vld [vmem:[#allocation0] sm:$0xf]
    %34 = vrot.lane.b32.xlu0 %v33, 123
    %v35 = vpop.permute.xlu0 %34
    %vm36 = vcmask 7168
    %s37 = scalar_lea.vmem %s1, 5
    %38 = vst.msk [vmem:[%s37] ss:$8 sm:$0xf] %vm36, %v35
    %v39 = vld [vmem:[#allocation0] sm:$0xf]
    %40 = vrot.lane.b32.xlu0 %v39, 122
    %v41 = vpop.permute.xlu0 %40
    %vm42 = vcmask 7168
    %s43 = scalar_lea.vmem %s1, 6
    %44 = vst.msk [vmem:[%s43] ss:$8 sm:$0xf] %vm42, %v41
    %v45 = vld [vmem:[#allocation0] sm:$0xf]
    %46 = vrot.lane.b32.xlu0 %v45, 121
    %v47 = vpop.permute.xlu0 %46
    %vm48 = vcmask 7168
    %s49 = scalar_lea.vmem %s1, 7
    %50 = vst.msk [vmem:[%s49] ss:$8 sm:$0xf] %vm48, %v47

// kernel: up_conv_forward.3
$region0: #{up_conv_forward.3}
  #allocation0 [shape = 'u32[]', space=smem, size = 0x4, offset = 0x4, fixed_abs, tag = 'smem constant byte address 0x4 - core index']
  #allocation1 [shape = 'u32[144,128]{1,0:T(1,128)}', space=vmem, size = 0x12000, scoped, tag = 'internal scratch']
  %s0 = inlined_call_operand.vmem [shape: f32[2,32,256], index: 0, kind: input, shape index: {}, may-alias: {0,3}]
  %s1 = inlined_call_operand.vmem [shape: f32[32,1], index: 1, kind: input, shape index: {}]
  %s2 = inlined_call_operand.vmem [shape: f32[32,1], index: 2, kind: input, shape index: {}]
  %s3 = inlined_call_operand.vmem [shape: f32[2,32,256], index: 3, kind: output, shape index: {}, may-alias: {0,3}]
  %s4 = sld [smem:[#allocation0]]
  $region45: #{up_conv_forward.3} parent=0
    _
  %s6 = ssub.s32 1, %s4
  %s7 = scalar_select 0, %s6, %s4
  loop: start=0, step=1, limit=4
  $region2: #{up_conv_forward.3} parent=0 // loop_pre_header
    _
  $region3: #{up_conv_forward.3} parent=0 // loop_header
    %s9 = sphi 0, %s13
    %p10 = scmp.ge.s32.totalorder %s9, 4
    %s19 = sphi 0, %s21
    %s22 = sphi 0, %s19
    %s23 = sphi 0, %s22
    %s39 = sphi 0, %s23
    %s43 = sphi 0, %s43
    %s45 = sphi 0, %s43
    %s46 = sphi 0, %s45
    %s60 = sphi 0, %s46
    %s64 = sphi 0, %s64
    %s66 = sphi 0, %s64
    %s67 = sphi 0, %s66
    %s81 = sphi 0, %s67
    %s87 = sphi 0, %s89
    %s90 = sphi 0, %s87
    %s91 = sphi 0, %s90
    %s107 = sphi 0, %s91
  $region4: #{up_conv_forward.3} parent=0 // loop_header_branch
    %12 = sbr.rel (%p10) target = $region8
  $region5: #{up_conv_forward.3} parent=0 // loop_body
    %s14 = ssub.s32 %s9, 1
    %s15 = ssub.s32 %s9, 2
    %s16 = sadd.s32 %s9, 1
    %s17 = ssub.s32 %s9, %s16
    %p18 = scmp.eq.s32.totalorder %s17, 0
    %s20 = sadd.s32 %s19, 1
    %s21 = scalar_select %p18, %s19, %s20
    %p24 = pneg %p18
    %p25 = scmp.eq.s32.totalorder %s9, 1
    %p26 = por %p24, %p25
    %p27 = scmp.ne.s32.totalorder %s19, %s22
    %p28 = scmp.eq.s32.totalorder %s9, 0
    %p29 = por %p27, %p28
    %p30 = scmp.ne.s32.totalorder %s19, %s22
    %p31 = scmp.eq.s32.totalorder %s14, 1
    %p32 = por %p30, %p31
    %p33 = scmp.ne.s32.totalorder %s22, %s23
    %p34 = scmp.eq.s32.totalorder %s14, 0
    %p35 = por %p33, %p34
    %p36 = scmp.ne.s32.totalorder %s22, %s23
    %p37 = scmp.eq.s32.totalorder %s15, 1
    %p38 = por %p36, %p37
    %p40 = scmp.ne.s32.totalorder %s23, %s39
    %p41 = scmp.eq.s32.totalorder %s15, 0
    %p42 = por %p40, %p41
    %s44 = sadd.s32 %s43, 1
    %p47 = scmp.eq.s32.totalorder %s9, 1
    %p48 = scmp.ne.s32.totalorder %s43, %s45
    %p49 = scmp.eq.s32.totalorder %s9, 0
    %p50 = por %p48, %p49
    %p51 = scmp.ne.s32.totalorder %s43, %s45
    %p52 = scmp.eq.s32.totalorder %s14, 1
    %p53 = por %p51, %p52
    %p54 = scmp.ne.s32.totalorder %s45, %s46
    %p55 = scmp.eq.s32.totalorder %s14, 0
    %p56 = por %p54, %p55
    %p57 = scmp.ne.s32.totalorder %s45, %s46
    %p58 = scmp.eq.s32.totalorder %s15, 1
    %p59 = por %p57, %p58
    %p61 = scmp.ne.s32.totalorder %s46, %s60
    %p62 = scmp.eq.s32.totalorder %s15, 0
    %p63 = por %p61, %p62
    %s65 = sadd.s32 %s64, 1
    %p68 = scmp.eq.s32.totalorder %s9, 1
    %p69 = scmp.ne.s32.totalorder %s64, %s66
    %p70 = scmp.eq.s32.totalorder %s9, 0
    %p71 = por %p69, %p70
    %p72 = scmp.ne.s32.totalorder %s64, %s66
    %p73 = scmp.eq.s32.totalorder %s14, 1
    %p74 = por %p72, %p73
    %p75 = scmp.ne.s32.totalorder %s66, %s67
    %p76 = scmp.eq.s32.totalorder %s14, 0
    %p77 = por %p75, %p76
    %p78 = scmp.ne.s32.totalorder %s66, %s67
    %p79 = scmp.eq.s32.totalorder %s15, 1
    %p80 = por %p78, %p79
    %p82 = scmp.ne.s32.totalorder %s67, %s81
    %p83 = scmp.eq.s32.totalorder %s15, 0
    %p84 = por %p82, %p83
    %s85 = ssub.s32 %s9, %s16
    %p86 = scmp.eq.s32.totalorder %s85, 0
    %s88 = sadd.s32 %s87, 1
    %s89 = scalar_select %p86, %s87, %s88
    %p92 = pneg %p86
    %p93 = scmp.eq.s32.totalorder %s9, 1
    %p94 = por %p92, %p93
    %p95 = scmp.ne.s32.totalorder %s87, %s90
    %p96 = scmp.eq.s32.totalorder %s9, 0
    %p97 = por %p95, %p96
    %p98 = scmp.ne.s32.totalorder %s87, %s90
    %p99 = scmp.eq.s32.totalorder %s14, 1
    %p100 = por %p98, %p99
    %p101 = scmp.ne.s32.totalorder %s90, %s91
    %p102 = scmp.eq.s32.totalorder %s14, 0
    %p103 = por %p101, %p102
    %p104 = scmp.ne.s32.totalorder %s90, %s91
    %p105 = scmp.eq.s32.totalorder %s15, 1
    %p106 = por %p104, %p105
    %p108 = scmp.ne.s32.totalorder %s91, %s107
    %p109 = scmp.eq.s32.totalorder %s15, 0
    %p110 = por %p108, %p109
    %p111 = scmp.le.s32.totalorder 1, %s9
    %p112 = scmp.lt.s32.totalorder %s9, 3
    %p113 = pnand %p111, %p112
    %p114 = pneg %p113
    // Predicated region
    $region9: #{up_conv_forward.3} parent=5 // pred_check
      _
    $region10: #{up_conv_forward.3} parent=5 // pred_check_branch
      %116 = sbr.rel (%p113) target = $region12
    $region11: #{up_conv_forward.3} parent=5 // pred_region
      %s117 = ssub.s32 %s9, 1
      // Predicated region
      $region13: #{up_conv_forward.3} parent=11 // pred_check
        %p118 = pneg %p56
      $region14: #{up_conv_forward.3} parent=11 // pred_check_branch
        %120 = sbr.rel (%p118) target = $region16
      $region15: #{up_conv_forward.3} parent=11 // pred_region
        _
      $region16: #{up_conv_forward.3} parent=11 // pred_fallthru
        _
      // Predicated region
      $region17: #{up_conv_forward.3} parent=11 // pred_check
        %p121 = pneg %p77
      $region18: #{up_conv_forward.3} parent=11 // pred_check_branch
        %123 = sbr.rel (%p121) target = $region20
      $region19: #{up_conv_forward.3} parent=11 // pred_region
        _
      $region20: #{up_conv_forward.3} parent=11 // pred_fallthru
        _
    $region12: #{up_conv_forward.3} parent=5 // pred_fallthru
      _
    %p124 = scmp.lt.s32.totalorder %s9, 2
    // Predicated region
    $region21: #{up_conv_forward.3} parent=5 // pred_check
      %p125 = pneg %p124
    $region22: #{up_conv_forward.3} parent=5 // pred_check_branch
      %127 = sbr.rel (%p125) target = $region24
    $region23: #{up_conv_forward.3} parent=5 // pred_region
      // Predicated region
      $region25: #{up_conv_forward.3} parent=23 // pred_check
        %p128 = pneg %p29
      $region26: #{up_conv_forward.3} parent=23 // pred_check_branch
        %130 = sbr.rel (%p128) target = $region28
      $region27: #{up_conv_forward.3} parent=23 // pred_region
        %p131 = scmp.lt.s32.totalorder %s9, 1
        %s132 = scalar_select %p131, %s9, 1
        %s133 = smul.addr %s132, 8
        %s134 = smul.addr %s133, 8
        %s135 = scalar_lea.vmem %s0, %s134
      $region28: #{up_conv_forward.3} parent=23 // pred_fallthru
        _
    $region24: #{up_conv_forward.3} parent=5 // pred_fallthru
      _
    %p136 = scmp.le.s32.totalorder 1, %s9
    %p137 = scmp.lt.s32.totalorder %s9, 3
    %p138 = pnand %p136, %p137
    %p139 = pneg %p138
    // Predicated region
    $region29: #{up_conv_forward.3} parent=5 // pred_check
      _
    $region30: #{up_conv_forward.3} parent=5 // pred_check_branch
      %141 = sbr.rel (%p138) target = $region32
    $region31: #{up_conv_forward.3} parent=5 // pred_region
      %s142 = ssub.s32 %s9, 1
      %p143 = scmp.lt.s32.totalorder %s14, 1
      %s144 = scalar_select %p143, %s14, 1
      %s145 = smul.addr %s144, 8
      %s146 = smul.addr %s145, 8
      %s147 = scalar_lea.vmem %s0, %s146
      %p148 = pneg %p35
      %p149 = pneg %p32
      %p150 = pneg %p56
      %p151 = pneg %p53
      %p152 = pneg %p77
      %p153 = pneg %p74
      %p154 = pneg %p103
      %p155 = pneg %p100
      %p156 = scmp.lt.s32.totalorder %s14, 1
      %s157 = scalar_select %p156, %s14, 1
      %s158 = smul.addr %s157, 8
      %s159 = smul.addr %s158, 8
      %s160 = scalar_lea.vmem %s3, %s159
      %p161 = scmp.lt.s32.totalorder %s14, 1
      %s162 = scalar_select %p161, %s14, 1
      %s163 = smul.addr %s162, 8
      %s164 = smul.addr %s163, 8
      %s165 = scalar_lea.vmem %s0, %s164
      %p166 = scmp.lt.s32.totalorder %s14, 1
      %s167 = scalar_select %p166, %s14, 1
      %s168 = smul.addr %s167, 8
      %s169 = smul.addr %s168, 8
      %s170 = scalar_lea.vmem %s3, %s169
      %v171 = vld [vmem:[%s165] sm:$0xff]
      %v172 = vld [vmem:[%s165 + $0x8] sm:$0xff]
      %v173 = vld [vmem:[%s165 + $0x10] sm:$0xff]
      %v174 = vld [vmem:[%s165 + $0x18] sm:$0xff]
      %v175 = vld [vmem:[%s165 + $0x20] sm:$0xff]
      %v176 = vld [vmem:[%s165 + $0x28] sm:$0xff]
      %v177 = vld [vmem:[%s165 + $0x30] sm:$0xff]
      %v178 = vld [vmem:[%s165 + $0x38] sm:$0xff]
      %v179 = vld [vmem:[%s1] sm:$0xff]
      %v180 = vld [vmem:[%s1 + $0x8] sm:$0xff]
      %v181 = vld [vmem:[%s1 + $0x10] sm:$0xff]
      %v182 = vld [vmem:[%s1 + $0x18] sm:$0xff]
      %184 = vset.pattern.permute.xlu0 0
      %185 = vperm.xlu0 %184, %v179
      %v186 = vpop.permute.xlu0 %185
      %189 = vset.pattern.permute.xlu0 0
      %190 = vperm.xlu0 %189, %v180
      %v191 = vpop.permute.xlu0 %190
      %194 = vset.pattern.permute.xlu0 0
      %195 = vperm.xlu0 %194, %v181
      %v196 = vpop.permute.xlu0 %195
      %199 = vset.pattern.permute.xlu0 0
      %200 = vperm.xlu0 %199, %v182
      %v201 = vpop.permute.xlu0 %200
      %v203 = vmul.f32 %v171, %v186
      %v204 = vmul.f32 %v172, %v186
      %v205 = vmul.f32 %v173, %v191
      %v206 = vmul.f32 %v174, %v191
      %v207 = vmul.f32 %v175, %v196
      %v208 = vmul.f32 %v176, %v196
      %v209 = vmul.f32 %v177, %v201
      %v210 = vmul.f32 %v178, %v201
      %v211 = vld [vmem:[%s2] sm:$0xff]
      %v212 = vld [vmem:[%s2 + $0x8] sm:$0xff]
      %v213 = vld [vmem:[%s2 + $0x10] sm:$0xff]
      %v214 = vld [vmem:[%s2 + $0x18] sm:$0xff]
      %216 = vset.pattern.permute.xlu0 0
      %217 = vperm.xlu0 %216, %v211
      %v218 = vpop.permute.xlu0 %217
      %221 = vset.pattern.permute.xlu0 0
      %222 = vperm.xlu0 %221, %v212
      %v223 = vpop.permute.xlu0 %222
      %226 = vset.pattern.permute.xlu0 0
      %227 = vperm.xlu0 %226, %v213
      %v228 = vpop.permute.xlu0 %227
      %231 = vset.pattern.permute.xlu0 0
      %232 = vperm.xlu0 %231, %v214
      %v233 = vpop.permute.xlu0 %232
      %v235 = vadd.f32 %v203, %v218
      %v236 = vadd.f32 %v204, %v218
      %v237 = vadd.f32 %v205, %v223
      %v238 = vadd.f32 %v206, %v223
      %v239 = vadd.f32 %v207, %v228
      %v240 = vadd.f32 %v208, %v228
      %v241 = vadd.f32 %v209, %v233
      %v242 = vadd.f32 %v210, %v233
      %v243 = vmax.f32 %v235, 0.0
      %v244 = vmax.f32 %v236, 0.0
      %v245 = vmax.f32 %v237, 0.0
      %v246 = vmax.f32 %v238, 0.0
      %v247 = vmax.f32 %v239, 0.0
      %v248 = vmax.f32 %v240, 0.0
      %v249 = vmax.f32 %v241, 0.0
      %v250 = vmax.f32 %v242, 0.0
      %251 = vst [vmem:[%s170] sm:$0xff] %v243
      %252 = vst [vmem:[%s170 + $0x8] sm:$0xff] %v244
      %253 = vst [vmem:[%s170 + $0x10] sm:$0xff] %v245
      %254 = vst [vmem:[%s170 + $0x18] sm:$0xff] %v246
      %255 = vst [vmem:[%s170 + $0x20] sm:$0xff] %v247
      %256 = vst [vmem:[%s170 + $0x28] sm:$0xff] %v248
      %257 = vst [vmem:[%s170 + $0x30] sm:$0xff] %v249
      %258 = vst [vmem:[%s170 + $0x38] sm:$0xff] %v250
      %p259 = scmp.lt.s32.totalorder %s14, 1
      %s260 = scalar_select %p259, %s14, 1
      %s261 = smul.addr %s260, 8
      %s262 = smul.addr %s261, 8
      %s263 = scalar_lea.vmem %s3, %s262
      // Predicated region
      $region33: #{up_conv_forward.3} parent=31 // pred_check
        %p264 = pneg %p100
      $region34: #{up_conv_forward.3} parent=31 // pred_check_branch
        %266 = sbr.rel (%p264) target = $region36
      $region35: #{up_conv_forward.3} parent=31 // pred_region
        _
      $region36: #{up_conv_forward.3} parent=31 // pred_fallthru
        _
    $region32: #{up_conv_forward.3} parent=5 // pred_fallthru
      _
    %p267 = scmp.le.s32.totalorder 2, %s9
    // Predicated region
    $region37: #{up_conv_forward.3} parent=5 // pred_check
      %p268 = pneg %p267
    $region38: #{up_conv_forward.3} parent=5 // pred_check_branch
      %270 = sbr.rel (%p268) target = $region40
    $region39: #{up_conv_forward.3} parent=5 // pred_region
      %s271 = ssub.s32 %s9, 2
      // Predicated region
      $region41: #{up_conv_forward.3} parent=39 // pred_check
        %p272 = pneg %p106
      $region42: #{up_conv_forward.3} parent=39 // pred_check_branch
        %274 = sbr.rel (%p272) target = $region44
      $region43: #{up_conv_forward.3} parent=39 // pred_region
        %p275 = scmp.lt.s32.totalorder %s15, 1
        %s276 = scalar_select %p275, %s15, 1
        %s277 = smul.addr %s276, 8
        %s278 = smul.addr %s277, 8
        %s279 = scalar_lea.vmem %s3, %s278
      $region44: #{up_conv_forward.3} parent=39 // pred_fallthru
        _
    $region40: #{up_conv_forward.3} parent=5 // pred_fallthru
      _
  $region6: #{up_conv_forward.3} parent=0 // loop_footer
    %s13 = sadd.s32 1, %s9
  $region7: #{up_conv_forward.3} parent=0 // loop_footer_branch
    %8 = sbr.rel target = $region3
  $region8: #{up_conv_forward.3} parent=0 // loop_exit
    _

// kernel: up_conv_forward.2
$region0: #{up_conv_forward.2}
  #allocation0 [shape = 'u32[]', space=smem, size = 0x4, offset = 0x4, fixed_abs, tag = 'smem constant byte address 0x4 - core index']
  #allocation1 [shape = 'u32[144,128]{1,0:T(1,128)}', space=vmem, size = 0x12000, scoped, tag = 'internal scratch']
  %s0 = inlined_call_operand.vmem [shape: f32[2,4,16,16], index: 0, kind: input, shape index: {}]
  %s1 = inlined_call_operand.vmem [shape: f32[32,36], index: 1, kind: input, shape index: {}]
  %s2 = inlined_call_operand.vmem [shape: f32[32,1], index: 2, kind: input, shape index: {}]
  %s3 = inlined_call_operand.vmem [shape: f32[2,32,256], index: 3, kind: output, shape index: {0}]
  %s4 = inlined_call_operand.vmem [shape: f32[2,32,2], index: 4, kind: output, shape index: {1}]
  %5 = xla_tuple %s3, %s4
  %s6 = sld [smem:[#allocation0]]
  $region53: #{up_conv_forward.2} parent=0
    _
  %s8 = ssub.s32 1, %s6
  %s9 = scalar_select 0, %s8, %s6
  loop: start=0, step=1, limit=4
  $region2: #{up_conv_forward.2} parent=0 // loop_pre_header
    _
  $region3: #{up_conv_forward.2} parent=0 // loop_header
    %s11 = sphi 0, %s15
    %p12 = scmp.ge.s32.totalorder %s11, 4
    %s21 = sphi 0, %s23
    %s24 = sphi 0, %s21
    %s25 = sphi 0, %s24
    %s41 = sphi 0, %s25
    %s45 = sphi 0, %s45
    %s47 = sphi 0, %s45
    %s48 = sphi 0, %s47
    %s62 = sphi 0, %s48
    %s66 = sphi 0, %s66
    %s68 = sphi 0, %s66
    %s69 = sphi 0, %s68
    %s83 = sphi 0, %s69
    %s89 = sphi 0, %s91
    %s92 = sphi 0, %s89
    %s93 = sphi 0, %s92
    %s109 = sphi 0, %s93
    %s115 = sphi 0, %s117
    %s118 = sphi 0, %s115
    %s119 = sphi 0, %s118
    %s135 = sphi 0, %s119
  $region4: #{up_conv_forward.2} parent=0 // loop_header_branch
    %14 = sbr.rel (%p12) target = $region8
  $region5: #{up_conv_forward.2} parent=0 // loop_body
    %s16 = ssub.s32 %s11, 1
    %s17 = ssub.s32 %s11, 2
    %s18 = sadd.s32 %s11, 1
    %s19 = ssub.s32 %s11, %s18
    %p20 = scmp.eq.s32.totalorder %s19, 0
    %s22 = sadd.s32 %s21, 1
    %s23 = scalar_select %p20, %s21, %s22
    %p26 = pneg %p20
    %p27 = scmp.eq.s32.totalorder %s11, 1
    %p28 = por %p26, %p27
    %p29 = scmp.ne.s32.totalorder %s21, %s24
    %p30 = scmp.eq.s32.totalorder %s11, 0
    %p31 = por %p29, %p30
    %p32 = scmp.ne.s32.totalorder %s21, %s24
    %p33 = scmp.eq.s32.totalorder %s16, 1
    %p34 = por %p32, %p33
    %p35 = scmp.ne.s32.totalorder %s24, %s25
    %p36 = scmp.eq.s32.totalorder %s16, 0
    %p37 = por %p35, %p36
    %p38 = scmp.ne.s32.totalorder %s24, %s25
    %p39 = scmp.eq.s32.totalorder %s17, 1
    %p40 = por %p38, %p39
    %p42 = scmp.ne.s32.totalorder %s25, %s41
    %p43 = scmp.eq.s32.totalorder %s17, 0
    %p44 = por %p42, %p43
    %s46 = sadd.s32 %s45, 1
    %p49 = scmp.eq.s32.totalorder %s11, 1
    %p50 = scmp.ne.s32.totalorder %s45, %s47
    %p51 = scmp.eq.s32.totalorder %s11, 0
    %p52 = por %p50, %p51
    %p53 = scmp.ne.s32.totalorder %s45, %s47
    %p54 = scmp.eq.s32.totalorder %s16, 1
    %p55 = por %p53, %p54
    %p56 = scmp.ne.s32.totalorder %s47, %s48
    %p57 = scmp.eq.s32.totalorder %s16, 0
    %p58 = por %p56, %p57
    %p59 = scmp.ne.s32.totalorder %s47, %s48
    %p60 = scmp.eq.s32.totalorder %s17, 1
    %p61 = por %p59, %p60
    %p63 = scmp.ne.s32.totalorder %s48, %s62
    %p64 = scmp.eq.s32.totalorder %s17, 0
    %p65 = por %p63, %p64
    %s67 = sadd.s32 %s66, 1
    %p70 = scmp.eq.s32.totalorder %s11, 1
    %p71 = scmp.ne.s32.totalorder %s66, %s68
    %p72 = scmp.eq.s32.totalorder %s11, 0
    %p73 = por %p71, %p72
    %p74 = scmp.ne.s32.totalorder %s66, %s68
    %p75 = scmp.eq.s32.totalorder %s16, 1
    %p76 = por %p74, %p75
    %p77 = scmp.ne.s32.totalorder %s68, %s69
    %p78 = scmp.eq.s32.totalorder %s16, 0
    %p79 = por %p77, %p78
    %p80 = scmp.ne.s32.totalorder %s68, %s69
    %p81 = scmp.eq.s32.totalorder %s17, 1
    %p82 = por %p80, %p81
    %p84 = scmp.ne.s32.totalorder %s69, %s83
    %p85 = scmp.eq.s32.totalorder %s17, 0
    %p86 = por %p84, %p85
    %s87 = ssub.s32 %s11, %s18
    %p88 = scmp.eq.s32.totalorder %s87, 0
    %s90 = sadd.s32 %s89, 1
    %s91 = scalar_select %p88, %s89, %s90
    %p94 = pneg %p88
    %p95 = scmp.eq.s32.totalorder %s11, 1
    %p96 = por %p94, %p95
    %p97 = scmp.ne.s32.totalorder %s89, %s92
    %p98 = scmp.eq.s32.totalorder %s11, 0
    %p99 = por %p97, %p98
    %p100 = scmp.ne.s32.totalorder %s89, %s92
    %p101 = scmp.eq.s32.totalorder %s16, 1
    %p102 = por %p100, %p101
    %p103 = scmp.ne.s32.totalorder %s92, %s93
    %p104 = scmp.eq.s32.totalorder %s16, 0
    %p105 = por %p103, %p104
    %p106 = scmp.ne.s32.totalorder %s92, %s93
    %p107 = scmp.eq.s32.totalorder %s17, 1
    %p108 = por %p106, %p107
    %p110 = scmp.ne.s32.totalorder %s93, %s109
    %p111 = scmp.eq.s32.totalorder %s17, 0
    %p112 = por %p110, %p111
    %s113 = ssub.s32 %s11, %s18
    %p114 = scmp.eq.s32.totalorder %s113, 0
    %s116 = sadd.s32 %s115, 1
    %s117 = scalar_select %p114, %s115, %s116
    %p120 = pneg %p114
    %p121 = scmp.eq.s32.totalorder %s11, 1
    %p122 = por %p120, %p121
    %p123 = scmp.ne.s32.totalorder %s115, %s118
    %p124 = scmp.eq.s32.totalorder %s11, 0
    %p125 = por %p123, %p124
    %p126 = scmp.ne.s32.totalorder %s115, %s118
    %p127 = scmp.eq.s32.totalorder %s16, 1
    %p128 = por %p126, %p127
    %p129 = scmp.ne.s32.totalorder %s118, %s119
    %p130 = scmp.eq.s32.totalorder %s16, 0
    %p131 = por %p129, %p130
    %p132 = scmp.ne.s32.totalorder %s118, %s119
    %p133 = scmp.eq.s32.totalorder %s17, 1
    %p134 = por %p132, %p133
    %p136 = scmp.ne.s32.totalorder %s119, %s135
    %p137 = scmp.eq.s32.totalorder %s17, 0
    %p138 = por %p136, %p137
    %p139 = scmp.le.s32.totalorder 1, %s11
    %p140 = scmp.lt.s32.totalorder %s11, 3
    %p141 = pnand %p139, %p140
    %p142 = pneg %p141
    // Predicated region
    $region9: #{up_conv_forward.2} parent=5 // pred_check
      _
    $region10: #{up_conv_forward.2} parent=5 // pred_check_branch
      %144 = sbr.rel (%p141) target = $region12
    $region11: #{up_conv_forward.2} parent=5 // pred_region
      %s145 = ssub.s32 %s11, 1
      // Predicated region
      $region13: #{up_conv_forward.2} parent=11 // pred_check
        %p146 = pneg %p58
      $region14: #{up_conv_forward.2} parent=11 // pred_check_branch
        %148 = sbr.rel (%p146) target = $region16
      $region15: #{up_conv_forward.2} parent=11 // pred_region
        _
      $region16: #{up_conv_forward.2} parent=11 // pred_fallthru
        _
      // Predicated region
      $region17: #{up_conv_forward.2} parent=11 // pred_check
        %p149 = pneg %p79
      $region18: #{up_conv_forward.2} parent=11 // pred_check_branch
        %151 = sbr.rel (%p149) target = $region20
      $region19: #{up_conv_forward.2} parent=11 // pred_region
        _
      $region20: #{up_conv_forward.2} parent=11 // pred_fallthru
        _
    $region12: #{up_conv_forward.2} parent=5 // pred_fallthru
      _
    %p152 = scmp.lt.s32.totalorder %s11, 2
    // Predicated region
    $region21: #{up_conv_forward.2} parent=5 // pred_check
      %p153 = pneg %p152
    $region22: #{up_conv_forward.2} parent=5 // pred_check_branch
      %155 = sbr.rel (%p153) target = $region24
    $region23: #{up_conv_forward.2} parent=5 // pred_region
      // Predicated region
      $region25: #{up_conv_forward.2} parent=23 // pred_check
        %p156 = pneg %p31
      $region26: #{up_conv_forward.2} parent=23 // pred_check_branch
        %158 = sbr.rel (%p156) target = $region28
      $region27: #{up_conv_forward.2} parent=23 // pred_region
        %p159 = scmp.lt.s32.totalorder %s11, 1
        %s160 = scalar_select %p159, %s11, 1
        %s161 = smul.addr %s160, 8
        %s162 = smul.addr %s161, 8
        %s163 = scalar_lea.vmem %s0, %s162
      $region28: #{up_conv_forward.2} parent=23 // pred_fallthru
        _
    $region24: #{up_conv_forward.2} parent=5 // pred_fallthru
      _
    %p164 = scmp.le.s32.totalorder 1, %s11
    %p165 = scmp.lt.s32.totalorder %s11, 3
    %p166 = pnand %p164, %p165
    %p167 = pneg %p166
    // Predicated region
    $region29: #{up_conv_forward.2} parent=5 // pred_check
      _
    $region30: #{up_conv_forward.2} parent=5 // pred_check_branch
      %169 = sbr.rel (%p166) target = $region32
    $region31: #{up_conv_forward.2} parent=5 // pred_region
      %s170 = ssub.s32 %s11, 1
      %p171 = scmp.lt.s32.totalorder %s16, 1
      %s172 = scalar_select %p171, %s16, 1
      %s173 = smul.addr %s172, 8
      %s174 = smul.addr %s173, 8
      %s175 = scalar_lea.vmem %s0, %s174
      %p176 = pneg %p37
      %p177 = pneg %p34
      %p178 = pneg %p58
      %p179 = pneg %p55
      %p180 = pneg %p79
      %p181 = pneg %p76
      %p182 = pneg %p105
      %p183 = pneg %p102
      %p184 = scmp.lt.s32.totalorder %s16, 1
      %s185 = scalar_select %p184, %s16, 1
      %s186 = smul.addr %s185, 8
      %s187 = smul.addr %s186, 8
      %s188 = scalar_lea.vmem %s3, %s187
      %p189 = pneg %p131
      %p190 = pneg %p128
      %p191 = scmp.lt.s32.totalorder %s16, 1
      %s192 = scalar_select %p191, %s16, 1
      %s193 = smul.addr %s192, 4
      %s194 = smul.addr %s193, 8
      %s195 = scalar_lea.vmem %s4, %s194
      %p196 = scmp.lt.s32.totalorder %s16, 1
      %s197 = scalar_select %p196, %s16, 1
      %s198 = smul.addr %s197, 8
      %s199 = smul.addr %s198, 8
      %s200 = scalar_lea.vmem %s0, %s199
      %p201 = scmp.lt.s32.totalorder %s16, 1
      %s202 = scalar_select %p201, %s16, 1
      %s203 = smul.addr %s202, 8
      %s204 = smul.addr %s203, 8
      %s205 = scalar_lea.vmem %s3, %s204
      %p206 = scmp.lt.s32.totalorder %s16, 1
      %s207 = scalar_select %p206, %s16, 1
      %s208 = smul.addr %s207, 4
      %s209 = smul.addr %s208, 8
      %s210 = scalar_lea.vmem %s4, %s209
      %v211 = vld [vmem:[%s200] sm:$0xff]
      %v212 = vld [vmem:[%s200 + $0x8] sm:$0xff]
      %v213 = vld [vmem:[%s200 + $0x10] sm:$0xff]
      %v214 = vld [vmem:[%s200 + $0x18] sm:$0xff]
      %v215 = vld [vmem:[%s200 + $0x20] sm:$0xff]
      %v216 = vld [vmem:[%s200 + $0x28] sm:$0xff]
      %v217 = vld [vmem:[%s200 + $0x30] sm:$0xff]
      %v218 = vld [vmem:[%s200 + $0x38] sm:$0xff]
      %vm227 = vcmask 1040384
      %v228 = vrot.slane %v211, 7
      %v229 = vrot.slane %v212, 7
      %v230 = vsel %vm227, %v228, %v229
      %v231 = vrot.slane %v213, 7
      %v232 = vrot.slane %v214, 7
      %v233 = vsel %vm227, %v231, %v232
      %v234 = vrot.slane %v215, 7
      %v235 = vrot.slane %v216, 7
      %v236 = vsel %vm227, %v234, %v235
      %v237 = vrot.slane %v217, 7
      %v238 = vrot.slane %v218, 7
      %v239 = vsel %vm227, %v237, %v238
      %v248 = vsel %vm227, 0.0, %v228
      %v249 = vsel %vm227, 0.0, %v231
      %v250 = vsel %vm227, 0.0, %v234
      %v251 = vsel %vm227, 0.0, %v237
      %v252 = vsel %vm227, %v229, 0.0
      %v253 = vsel %vm227, %v232, 0.0
      %v254 = vsel %vm227, %v235, 0.0
      %v255 = vsel %vm227, %v238, 0.0
      %264 = vrot.lane.b32.xlu0 %v248, 1
      %v265 = vpop.permute.xlu0 %264
      %266 = vrot.lane.b32.xlu0 %v230, 1
      %v267 = vpop.permute.xlu0 %266
      %268 = vrot.lane.b32.xlu0 %v252, 1
      %v269 = vpop.permute.xlu0 %268
      %270 = vrot.lane.b32.xlu0 %v249, 1
      %v271 = vpop.permute.xlu0 %270
      %272 = vrot.lane.b32.xlu0 %v233, 1
      %v273 = vpop.permute.xlu0 %272
      %274 = vrot.lane.b32.xlu0 %v253, 1
      %v275 = vpop.permute.xlu0 %274
      %276 = vrot.lane.b32.xlu0 %v250, 1
      %v277 = vpop.permute.xlu0 %276
      %278 = vrot.lane.b32.xlu0 %v236, 1
      %v279 = vpop.permute.xlu0 %278
      %280 = vrot.lane.b32.xlu0 %v254, 1
      %v281 = vpop.permute.xlu0 %280
      %282 = vrot.lane.b32.xlu0 %v251, 1
      %v283 = vpop.permute.xlu0 %282
      %284 = vrot.lane.b32.xlu0 %v239, 1
      %v285 = vpop.permute.xlu0 %284
      %286 = vrot.lane.b32.xlu0 %v255, 1
      %v287 = vpop.permute.xlu0 %286
      %vm300 = vcmask 7168
      %v301 = vsel %vm300, 0.0, %v265
      %v302 = vsel %vm300, 0.0, %v267
      %v303 = vsel %vm300, 0.0, %v269
      %v304 = vsel %vm300, 0.0, %v271
      %v305 = vsel %vm300, 0.0, %v273
      %v306 = vsel %vm300, 0.0, %v275
      %v307 = vsel %vm300, 0.0, %v277
      %v308 = vsel %vm300, 0.0, %v279
      %v309 = vsel %vm300, 0.0, %v281
      %v310 = vsel %vm300, 0.0, %v283
      %v311 = vsel %vm300, 0.0, %v285
      %v312 = vsel %vm300, 0.0, %v287
      %vm313 = vcmask 138240
      %v314 = vsel %vm313, %v301, 0.0
      %v315 = vsel %vm313, %v302, 0.0
      %v316 = vsel %vm313, %v303, 0.0
      %v317 = vsel %vm313, %v304, 0.0
      %v318 = vsel %vm313, %v305, 0.0
      %v319 = vsel %vm313, %v306, 0.0
      %v320 = vsel %vm313, %v307, 0.0
      %v321 = vsel %vm313, %v308, 0.0
      %v322 = vsel %vm313, %v309, 0.0
      %v323 = vsel %vm313, %v310, 0.0
      %v324 = vsel %vm313, %v311, 0.0
      %v325 = vsel %vm313, %v312, 0.0
      %v326 = vcombine.low %v314, %v320
      %v327 = vcombine.high %v314, %v320
      %v329 = vunpack.c.l.s4 1983009808
      %v330 = vunpack.c.0.s8 %v329
      %v331 = vlaneseq
      %v332 = vshrl.u32 %v331, 7
      %v333 = vsub.s32 %v330, %v332
      %v334 = vrot.slane %v326, %v333
      %v336 = vunpack.c.l.s4 1983009808
      %v337 = vunpack.c.0.s8 %v336
      %v338 = vlaneseq
      %v339 = vshrl.u32 %v338, 7
      %v340 = vsub.s32 %v337, %v339
      %v341 = vrot.slane %v327, %v340
      %v342 = vcombine.low %v317, %v323
      %v343 = vcombine.high %v317, %v323
      %v345 = vunpack.c.l.s4 1983009808
      %v346 = vunpack.c.0.s8 %v345
      %v347 = vlaneseq
      %v348 = vshrl.u32 %v347, 7
      %v349 = vsub.s32 %v346, %v348
      %v350 = vrot.slane %v342, %v349
      %v352 = vunpack.c.l.s4 1983009808
      %v353 = vunpack.c.0.s8 %v352
      %v354 = vlaneseq
      %v355 = vshrl.u32 %v354, 7
      %v356 = vsub.s32 %v353, %v355
      %v357 = vrot.slane %v343, %v356
      %v358 = vcombine.low %v334, %v350
      %v359 = vcombine.high %v334, %v350
      %v361 = vunpack.c.l.s4 1934713408
      %v362 = vunpack.c.0.s8 %v361
      %v363 = vlaneseq
      %v364 = vshrl.u32 %v363, 7
      %v365 = vsub.s32 %v362, %v364
      %v366 = vrot.slane %v358, %v365
      %v368 = vunpack.c.l.s4 1934713408
      %v369 = vunpack.c.0.s8 %v368
      %v370 = vlaneseq
      %v371 = vshrl.u32 %v370, 7
      %v372 = vsub.s32 %v369, %v371
      %v373 = vrot.slane %v359, %v372
      %v374 = vcombine.low %v341, %v357
      %v375 = vcombine.high %v341, %v357
      %v377 = vunpack.c.l.s4 1934713408
      %v378 = vunpack.c.0.s8 %v377
      %v379 = vlaneseq
      %v380 = vshrl.u32 %v379, 7
      %v381 = vsub.s32 %v378, %v380
      %v382 = vrot.slane %v374, %v381
      %v384 = vunpack.c.l.s4 1934713408
      %v385 = vunpack.c.0.s8 %v384
      %v386 = vlaneseq
      %v387 = vshrl.u32 %v386, 7
      %v388 = vsub.s32 %v385, %v387
      %v389 = vrot.slane %v375, %v388
      %v390 = vcombine.high %v366, 0.0
      %v391 = vcombine.high %v373, 0.0
      %v392 = vcombine.high %v382, 0.0
      %v393 = vcombine.high %v389, 0.0
      %v394 = vcombine.low %v315, %v321
      %v395 = vcombine.high %v315, %v321
      %v397 = vunpack.c.l.s4 1983009808
      %v398 = vunpack.c.0.s8 %v397
      %v399 = vlaneseq
      %v400 = vshrl.u32 %v399, 7
      %v401 = vsub.s32 %v398, %v400
      %v402 = vrot.slane %v394, %v401
      %v404 = vunpack.c.l.s4 1983009808
      %v405 = vunpack.c.0.s8 %v404
      %v406 = vlaneseq
      %v407 = vshrl.u32 %v406, 7
      %v408 = vsub.s32 %v405, %v407
      %v409 = vrot.slane %v395, %v408
      %v410 = vcombine.low %v318, %v324
      %v411 = vcombine.high %v318, %v324
      %v413 = vunpack.c.l.s4 1983009808
      %v414 = vunpack.c.0.s8 %v413
      %v415 = vlaneseq
      %v416 = vshrl.u32 %v415, 7
      %v417 = vsub.s32 %v414, %v416
      %v418 = vrot.slane %v410, %v417
      %v420 = vunpack.c.l.s4 1983009808
      %v421 = vunpack.c.0.s8 %v420
      %v422 = vlaneseq
      %v423 = vshrl.u32 %v422, 7
      %v424 = vsub.s32 %v421, %v423
      %v425 = vrot.slane %v411, %v424
      %v426 = vcombine.low %v402, %v418
      %v427 = vcombine.high %v402, %v418
      %v429 = vunpack.c.l.s4 1934713408
      %v430 = vunpack.c.0.s8 %v429
      %v431 = vlaneseq
      %v432 = vshrl.u32 %v431, 7
      %v433 = vsub.s32 %v430, %v432
      %v434 = vrot.slane %v426, %v433
      %v436 = vunpack.c.l.s4 1934713408
      %v437 = vunpack.c.0.s8 %v436
      %v438 = vlaneseq
      %v439 = vshrl.u32 %v438, 7
      %v440 = vsub.s32 %v437, %v439
      %v441 = vrot.slane %v427, %v440
      %v442 = vcombine.low %v409, %v425
      %v443 = vcombine.high %v409, %v425
      %v445 = vunpack.c.l.s4 1934713408
      %v446 = vunpack.c.0.s8 %v445
      %v447 = vlaneseq
      %v448 = vshrl.u32 %v447, 7
      %v449 = vsub.s32 %v446, %v448
      %v450 = vrot.slane %v442, %v449
      %v452 = vunpack.c.l.s4 1934713408
      %v453 = vunpack.c.0.s8 %v452
      %v454 = vlaneseq
      %v455 = vshrl.u32 %v454, 7
      %v456 = vsub.s32 %v453, %v455
      %v457 = vrot.slane %v443, %v456
      %v458 = vcombine.high %v434, 0.0
      %v459 = vcombine.high %v441, 0.0
      %v460 = vcombine.high %v450, 0.0
      %v461 = vcombine.high %v457, 0.0
      %463 = vrot.lane.b32.xlu0 %v390, 16
      %v464 = vpop.permute.xlu0 %463
      %467 = vrot.lane.b32.xlu0 %v373, 32
      %v468 = vpop.permute.xlu0 %467
      %471 = vrot.lane.b32.xlu0 %v391, 48
      %v472 = vpop.permute.xlu0 %471
      %475 = vrot.lane.b32.xlu0 %v382, 64
      %v476 = vpop.permute.xlu0 %475
      %479 = vrot.lane.b32.xlu0 %v392, 80
      %v480 = vpop.permute.xlu0 %479
      %483 = vrot.lane.b32.xlu0 %v389, 96
      %v484 = vpop.permute.xlu0 %483
      %487 = vrot.lane.b32.xlu0 %v393, 112
      %v488 = vpop.permute.xlu0 %487
      %491 = vrot.lane.b32.xlu0 %v458, 16
      %v492 = vpop.permute.xlu0 %491
      %495 = vrot.lane.b32.xlu0 %v441, 32
      %v496 = vpop.permute.xlu0 %495
      %499 = vrot.lane.b32.xlu0 %v459, 48
      %v500 = vpop.permute.xlu0 %499
      %503 = vrot.lane.b32.xlu0 %v450, 64
      %v504 = vpop.permute.xlu0 %503
      %507 = vrot.lane.b32.xlu0 %v460, 80
      %v508 = vpop.permute.xlu0 %507
      %511 = vrot.lane.b32.xlu0 %v457, 96
      %v512 = vpop.permute.xlu0 %511
      %515 = vrot.lane.b32.xlu0 %v461, 112
      %v516 = vpop.permute.xlu0 %515
      %vm518 = vcmask 130048
      %v519 = vsel %vm518, %v366, %v464
      %vm520 = vcmask 261120
      %v521 = vsel %vm520, %v519, %v468
      %vm522 = vcmask 392192
      %v523 = vsel %vm522, %v521, %v472
      %vm524 = vcmask 523264
      %v525 = vsel %vm524, %v523, %v476
      %vm526 = vcmask 654336
      %v527 = vsel %vm526, %v525, %v480
      %vm528 = vcmask 785408
      %v529 = vsel %vm528, %v527, %v484
      %vm530 = vcmask 916480
      %v531 = vsel %vm530, %v529, %v488
      %v532 = vsel %vm518, %v434, %v492
      %v533 = vsel %vm520, %v532, %v496
      %v534 = vsel %vm522, %v533, %v500
      %v535 = vsel %vm524, %v534, %v504
      %v536 = vsel %vm526, %v535, %v508
      %v537 = vsel %vm528, %v536, %v512
      %v538 = vsel %vm530, %v537, %v516
      %547 = vrot.lane.b32.xlu0 %v314, 127
      %v548 = vpop.permute.xlu0 %547
      %549 = vrot.lane.b32.xlu0 %v315, 127
      %v550 = vpop.permute.xlu0 %549
      %551 = vrot.lane.b32.xlu0 %v317, 127
      %v552 = vpop.permute.xlu0 %551
      %553 = vrot.lane.b32.xlu0 %v318, 127
      %v554 = vpop.permute.xlu0 %553
      %555 = vrot.lane.b32.xlu0 %v320, 127
      %v556 = vpop.permute.xlu0 %555
      %557 = vrot.lane.b32.xlu0 %v321, 127
      %v558 = vpop.permute.xlu0 %557
      %559 = vrot.lane.b32.xlu0 %v323, 127
      %v560 = vpop.permute.xlu0 %559
      %561 = vrot.lane.b32.xlu0 %v324, 127
      %v562 = vpop.permute.xlu0 %561
      %v571 = vcombine.low %v548, %v556
      %v572 = vcombine.high %v548, %v556
      %v574 = vunpack.c.l.s4 1983009808
      %v575 = vunpack.c.0.s8 %v574
      %v576 = vlaneseq
      %v577 = vshrl.u32 %v576, 7
      %v578 = vsub.s32 %v575, %v577
      %v579 = vrot.slane %v571, %v578
      %v581 = vunpack.c.l.s4 1983009808
      %v582 = vunpack.c.0.s8 %v581
      %v583 = vlaneseq
      %v584 = vshrl.u32 %v583, 7
      %v585 = vsub.s32 %v582, %v584
      %v586 = vrot.slane %v572, %v585
      %v587 = vcombine.low %v552, %v560
      %v588 = vcombine.high %v552, %v560
      %v590 = vunpack.c.l.s4 1983009808
      %v591 = vunpack.c.0.s8 %v590
      %v592 = vlaneseq
      %v593 = vshrl.u32 %v592, 7
      %v594 = vsub.s32 %v591, %v593
      %v595 = vrot.slane %v587, %v594
      %v597 = vunpack.c.l.s4 1983009808
      %v598 = vunpack.c.0.s8 %v597
      %v599 = vlaneseq
      %v600 = vshrl.u32 %v599, 7
      %v601 = vsub.s32 %v598, %v600
      %v602 = vrot.slane %v588, %v601
      %v603 = vcombine.low %v579, %v595
      %v604 = vcombine.high %v579, %v595
      %v606 = vunpack.c.l.s4 1934713408
      %v607 = vunpack.c.0.s8 %v606
      %v608 = vlaneseq
      %v609 = vshrl.u32 %v608, 7
      %v610 = vsub.s32 %v607, %v609
      %v611 = vrot.slane %v603, %v610
      %v613 = vunpack.c.l.s4 1934713408
      %v614 = vunpack.c.0.s8 %v613
      %v615 = vlaneseq
      %v616 = vshrl.u32 %v615, 7
      %v617 = vsub.s32 %v614, %v616
      %v618 = vrot.slane %v604, %v617
      %v619 = vcombine.low %v586, %v602
      %v620 = vcombine.high %v586, %v602
      %v622 = vunpack.c.l.s4 1934713408
      %v623 = vunpack.c.0.s8 %v622
      %v624 = vlaneseq
      %v625 = vshrl.u32 %v624, 7
      %v626 = vsub.s32 %v623, %v625
      %v627 = vrot.slane %v619, %v626
      %v629 = vunpack.c.l.s4 1934713408
      %v630 = vunpack.c.0.s8 %v629
      %v631 = vlaneseq
      %v632 = vshrl.u32 %v631, 7
      %v633 = vsub.s32 %v630, %v632
      %v634 = vrot.slane %v620, %v633
      %v635 = vcombine.high %v611, 0.0
      %v636 = vcombine.high %v618, 0.0
      %v637 = vcombine.high %v627, 0.0
      %v638 = vcombine.high %v634, 0.0
      %v639 = vcombine.low %v550, %v558
      %v640 = vcombine.high %v550, %v558
      %v642 = vunpack.c.l.s4 1983009808
      %v643 = vunpack.c.0.s8 %v642
      %v644 = vlaneseq
      %v645 = vshrl.u32 %v644, 7
      %v646 = vsub.s32 %v643, %v645
      %v647 = vrot.slane %v639, %v646
      %v649 = vunpack.c.l.s4 1983009808
      %v650 = vunpack.c.0.s8 %v649
      %v651 = vlaneseq
      %v652 = vshrl.u32 %v651, 7
      %v653 = vsub.s32 %v650, %v652
      %v654 = vrot.slane %v640, %v653
      %v655 = vcombine.low %v554, %v562
      %v656 = vcombine.high %v554, %v562
      %v658 = vunpack.c.l.s4 1983009808
      %v659 = vunpack.c.0.s8 %v658
      %v660 = vlaneseq
      %v661 = vshrl.u32 %v660, 7
      %v662 = vsub.s32 %v659, %v661
      %v663 = vrot.slane %v655, %v662
      %v665 = vunpack.c.l.s4 1983009808
      %v666 = vunpack.c.0.s8 %v665
      %v667 = vlaneseq
      %v668 = vshrl.u32 %v667, 7
      %v669 = vsub.s32 %v666, %v668
      %v670 = vrot.slane %v656, %v669
      %v671 = vcombine.low %v647, %v663
      %v672 = vcombine.high %v647, %v663
      %v674 = vunpack.c.l.s4 1934713408
      %v675 = vunpack.c.0.s8 %v674
      %v676 = vlaneseq
      %v677 = vshrl.u32 %v676, 7
      %v678 = vsub.s32 %v675, %v677
      %v679 = vrot.slane %v671, %v678
      %v681 = vunpack.c.l.s4 1934713408
      %v682 = vunpack.c.0.s8 %v681
      %v683 = vlaneseq
      %v684 = vshrl.u32 %v683, 7
      %v685 = vsub.s32 %v682, %v684
      %v686 = vrot.slane %v672, %v685
      %v687 = vcombine.low %v654, %v670
      %v688 = vcombine.high %v654, %v670
      %v690 = vunpack.c.l.s4 1934713408
      %v691 = vunpack.c.0.s8 %v690
      %v692 = vlaneseq
      %v693 = vshrl.u32 %v692, 7
      %v694 = vsub.s32 %v691, %v693
      %v695 = vrot.slane %v687, %v694
      %v697 = vunpack.c.l.s4 1934713408
      %v698 = vunpack.c.0.s8 %v697
      %v699 = vlaneseq
      %v700 = vshrl.u32 %v699, 7
      %v701 = vsub.s32 %v698, %v700
      %v702 = vrot.slane %v688, %v701
      %v703 = vcombine.high %v679, 0.0
      %v704 = vcombine.high %v686, 0.0
      %v705 = vcombine.high %v695, 0.0
      %v706 = vcombine.high %v702, 0.0
      %708 = vrot.lane.b32.xlu0 %v635, 16
      %v709 = vpop.permute.xlu0 %708
      %712 = vrot.lane.b32.xlu0 %v618, 32
      %v713 = vpop.permute.xlu0 %712
      %716 = vrot.lane.b32.xlu0 %v636, 48
      %v717 = vpop.permute.xlu0 %716
      %720 = vrot.lane.b32.xlu0 %v627, 64
      %v721 = vpop.permute.xlu0 %720
      %724 = vrot.lane.b32.xlu0 %v637, 80
      %v725 = vpop.permute.xlu0 %724
      %728 = vrot.lane.b32.xlu0 %v634, 96
      %v729 = vpop.permute.xlu0 %728
      %732 = vrot.lane.b32.xlu0 %v638, 112
      %v733 = vpop.permute.xlu0 %732
      %736 = vrot.lane.b32.xlu0 %v703, 16
      %v737 = vpop.permute.xlu0 %736
      %740 = vrot.lane.b32.xlu0 %v686, 32
      %v741 = vpop.permute.xlu0 %740
      %744 = vrot.lane.b32.xlu0 %v704, 48
      %v745 = vpop.permute.xlu0 %744
      %748 = vrot.lane.b32.xlu0 %v695, 64
      %v749 = vpop.permute.xlu0 %748
      %752 = vrot.lane.b32.xlu0 %v705, 80
      %v753 = vpop.permute.xlu0 %752
      %756 = vrot.lane.b32.xlu0 %v702, 96
      %v757 = vpop.permute.xlu0 %756
      %760 = vrot.lane.b32.xlu0 %v706, 112
      %v761 = vpop.permute.xlu0 %760
      %v763 = vsel %vm518, %v611, %v709
      %v764 = vsel %vm520, %v763, %v713
      %v765 = vsel %vm522, %v764, %v717
      %v766 = vsel %vm524, %v765, %v721
      %v767 = vsel %vm526, %v766, %v725
      %v768 = vsel %vm528, %v767, %v729
      %v769 = vsel %vm530, %v768, %v733
      %v770 = vsel %vm518, %v679, %v737
      %v771 = vsel %vm520, %v770, %v741
      %v772 = vsel %vm522, %v771, %v745
      %v773 = vsel %vm524, %v772, %v749
      %v774 = vsel %vm526, %v773, %v753
      %v775 = vsel %vm528, %v774, %v757
      %v776 = vsel %vm530, %v775, %v761
      %777 = vrot.lane.b32.xlu0 %v314, 126
      %v778 = vpop.permute.xlu0 %777
      %779 = vrot.lane.b32.xlu0 %v315, 126
      %v780 = vpop.permute.xlu0 %779
      %781 = vrot.lane.b32.xlu0 %v317, 126
      %v782 = vpop.permute.xlu0 %781
      %783 = vrot.lane.b32.xlu0 %v318, 126
      %v784 = vpop.permute.xlu0 %783
      %785 = vrot.lane.b32.xlu0 %v320, 126
      %v786 = vpop.permute.xlu0 %785
      %787 = vrot.lane.b32.xlu0 %v321, 126
      %v788 = vpop.permute.xlu0 %787
      %789 = vrot.lane.b32.xlu0 %v323, 126
      %v790 = vpop.permute.xlu0 %789
      %791 = vrot.lane.b32.xlu0 %v324, 126
      %v792 = vpop.permute.xlu0 %791
      %v801 = vcombine.low %v778, %v786
      %v802 = vcombine.high %v778, %v786
      %v804 = vunpack.c.l.s4 1983009808
      %v805 = vunpack.c.0.s8 %v804
      %v806 = vlaneseq
      %v807 = vshrl.u32 %v806, 7
      %v808 = vsub.s32 %v805, %v807
      %v809 = vrot.slane %v801, %v808
      %v811 = vunpack.c.l.s4 1983009808
      %v812 = vunpack.c.0.s8 %v811
      %v813 = vlaneseq
      %v814 = vshrl.u32 %v813, 7
      %v815 = vsub.s32 %v812, %v814
      %v816 = vrot.slane %v802, %v815
      %v817 = vcombine.low %v782, %v790
      %v818 = vcombine.high %v782, %v790
      %v820 = vunpack.c.l.s4 1983009808
      %v821 = vunpack.c.0.s8 %v820
      %v822 = vlaneseq
      %v823 = vshrl.u32 %v822, 7
      %v824 = vsub.s32 %v821, %v823
      %v825 = vrot.slane %v817, %v824
      %v827 = vunpack.c.l.s4 1983009808
      %v828 = vunpack.c.0.s8 %v827
      %v829 = vlaneseq
      %v830 = vshrl.u32 %v829, 7
      %v831 = vsub.s32 %v828, %v830
      %v832 = vrot.slane %v818, %v831
      %v833 = vcombine.low %v809, %v825
      %v834 = vcombine.high %v809, %v825
      %v836 = vunpack.c.l.s4 1934713408
      %v837 = vunpack.c.0.s8 %v836
      %v838 = vlaneseq
      %v839 = vshrl.u32 %v838, 7
      %v840 = vsub.s32 %v837, %v839
      %v841 = vrot.slane %v833, %v840
      %v843 = vunpack.c.l.s4 1934713408
      %v844 = vunpack.c.0.s8 %v843
      %v845 = vlaneseq
      %v846 = vshrl.u32 %v845, 7
      %v847 = vsub.s32 %v844, %v846
      %v848 = vrot.slane %v834, %v847
      %v849 = vcombine.low %v816, %v832
      %v850 = vcombine.high %v816, %v832
      %v852 = vunpack.c.l.s4 1934713408
      %v853 = vunpack.c.0.s8 %v852
      %v854 = vlaneseq
      %v855 = vshrl.u32 %v854, 7
      %v856 = vsub.s32 %v853, %v855
      %v857 = vrot.slane %v849, %v856
      %v859 = vunpack.c.l.s4 1934713408
      %v860 = vunpack.c.0.s8 %v859
      %v861 = vlaneseq
      %v862 = vshrl.u32 %v861, 7
      %v863 = vsub.s32 %v860, %v862
      %v864 = vrot.slane %v850, %v863
      %v865 = vcombine.high %v841, 0.0
      %v866 = vcombine.high %v848, 0.0
      %v867 = vcombine.high %v857, 0.0
      %v868 = vcombine.high %v864, 0.0
      %v869 = vcombine.low %v780, %v788
      %v870 = vcombine.high %v780, %v788
      %v872 = vunpack.c.l.s4 1983009808
      %v873 = vunpack.c.0.s8 %v872
      %v874 = vlaneseq
      %v875 = vshrl.u32 %v874, 7
      %v876 = vsub.s32 %v873, %v875
      %v877 = vrot.slane %v869, %v876
      %v879 = vunpack.c.l.s4 1983009808
      %v880 = vunpack.c.0.s8 %v879
      %v881 = vlaneseq
      %v882 = vshrl.u32 %v881, 7
      %v883 = vsub.s32 %v880, %v882
      %v884 = vrot.slane %v870, %v883
      %v885 = vcombine.low %v784, %v792
      %v886 = vcombine.high %v784, %v792
      %v888 = vunpack.c.l.s4 1983009808
      %v889 = vunpack.c.0.s8 %v888
      %v890 = vlaneseq
      %v891 = vshrl.u32 %v890, 7
      %v892 = vsub.s32 %v889, %v891
      %v893 = vrot.slane %v885, %v892
      %v895 = vunpack.c.l.s4 1983009808
      %v896 = vunpack.c.0.s8 %v895
      %v897 = vlaneseq
      %v898 = vshrl.u32 %v897, 7
      %v899 = vsub.s32 %v896, %v898
      %v900 = vrot.slane %v886, %v899
      %v901 = vcombine.low %v877, %v893
      %v902 = vcombine.high %v877, %v893
      %v904 = vunpack.c.l.s4 1934713408
      %v905 = vunpack.c.0.s8 %v904
      %v906 = vlaneseq
      %v907 = vshrl.u32 %v906, 7
      %v908 = vsub.s32 %v905, %v907
      %v909 = vrot.slane %v901, %v908
      %v911 = vunpack.c.l.s4 1934713408
      %v912 = vunpack.c.0.s8 %v911
      %v913 = vlaneseq
      %v914 = vshrl.u32 %v913, 7
      %v915 = vsub.s32 %v912, %v914
      %v916 = vrot.slane %v902, %v915
      %v917 = vcombine.low %v884, %v900
      %v918 = vcombine.high %v884, %v900
      %v920 = vunpack.c.l.s4 1934713408
      %v921 = vunpack.c.0.s8 %v920
      %v922 = vlaneseq
      %v923 = vshrl.u32 %v922, 7
      %v924 = vsub.s32 %v921, %v923
      %v925 = vrot.slane %v917, %v924
      %v927 = vunpack.c.l.s4 1934713408
      %v928 = vunpack.c.0.s8 %v927
      %v929 = vlaneseq
      %v930 = vshrl.u32 %v929, 7
      %v931 = vsub.s32 %v928, %v930
      %v932 = vrot.slane %v918, %v931
      %v933 = vcombine.high %v909, 0.0
      %v934 = vcombine.high %v916, 0.0
      %v935 = vcombine.high %v925, 0.0
      %v936 = vcombine.high %v932, 0.0
      %938 = vrot.lane.b32.xlu0 %v865, 16
      %v939 = vpop.permute.xlu0 %938
      %942 = vrot.lane.b32.xlu0 %v848, 32
      %v943 = vpop.permute.xlu0 %942
      %946 = vrot.lane.b32.xlu0 %v866, 48
      %v947 = vpop.permute.xlu0 %946
      %950 = vrot.lane.b32.xlu0 %v857, 64
      %v951 = vpop.permute.xlu0 %950
      %954 = vrot.lane.b32.xlu0 %v867, 80
      %v955 = vpop.permute.xlu0 %954
      %958 = vrot.lane.b32.xlu0 %v864, 96
      %v959 = vpop.permute.xlu0 %958
      %962 = vrot.lane.b32.xlu0 %v868, 112
      %v963 = vpop.permute.xlu0 %962
      %966 = vrot.lane.b32.xlu0 %v933, 16
      %v967 = vpop.permute.xlu0 %966
      %970 = vrot.lane.b32.xlu0 %v916, 32
      %v971 = vpop.permute.xlu0 %970
      %974 = vrot.lane.b32.xlu0 %v934, 48
      %v975 = vpop.permute.xlu0 %974
      %978 = vrot.lane.b32.xlu0 %v925, 64
      %v979 = vpop.permute.xlu0 %978
      %982 = vrot.lane.b32.xlu0 %v935, 80
      %v983 = vpop.permute.xlu0 %982
      %986 = vrot.lane.b32.xlu0 %v932, 96
      %v987 = vpop.permute.xlu0 %986
      %990 = vrot.lane.b32.xlu0 %v936, 112
      %v991 = vpop.permute.xlu0 %990
      %v993 = vsel %vm518, %v841, %v939
      %v994 = vsel %vm520, %v993, %v943
      %v995 = vsel %vm522, %v994, %v947
      %v996 = vsel %vm524, %v995, %v951
      %v997 = vsel %vm526, %v996, %v955
      %v998 = vsel %vm528, %v997, %v959
      %v999 = vsel %vm530, %v998, %v963
      %v1000 = vsel %vm518, %v909, %v967
      %v1001 = vsel %vm520, %v1000, %v971
      %v1002 = vsel %vm522, %v1001, %v975
      %v1003 = vsel %vm524, %v1002, %v979
      %v1004 = vsel %vm526, %v1003, %v983
      %v1005 = vsel %vm528, %v1004, %v987
      %v1006 = vsel %vm530, %v1005, %v991
      %vm1011 = vcmask 1046528
      %v1012 = vrot.slane %v314, 1
      %v1013 = vrot.slane %v315, 1
      %v1014 = vsel %vm1011, %v1012, %v1013
      %v1015 = vrot.slane %v316, 1
      %v1016 = vsel %vm1011, %v1013, %v1015
      %v1017 = vrot.slane %v317, 1
      %v1018 = vrot.slane %v318, 1
      %v1019 = vsel %vm1011, %v1017, %v1018
      %v1020 = vrot.slane %v319, 1
      %v1021 = vsel %vm1011, %v1018, %v1020
      %v1022 = vrot.slane %v320, 1
      %v1023 = vrot.slane %v321, 1
      %v1024 = vsel %vm1011, %v1022, %v1023
      %v1025 = vrot.slane %v322, 1
      %v1026 = vsel %vm1011, %v1023, %v1025
      %v1027 = vrot.slane %v323, 1
      %v1028 = vrot.slane %v324, 1
      %v1029 = vsel %vm1011, %v1027, %v1028
      %v1030 = vrot.slane %v325, 1
      %v1031 = vsel %vm1011, %v1028, %v1030
      %v1040 = vcombine.low %v1014, %v1024
      %v1041 = vcombine.high %v1014, %v1024
      %v1043 = vunpack.c.l.s4 1983009808
      %v1044 = vunpack.c.0.s8 %v1043
      %v1045 = vlaneseq
      %v1046 = vshrl.u32 %v1045, 7
      %v1047 = vsub.s32 %v1044, %v1046
      %v1048 = vrot.slane %v1040, %v1047
      %v1050 = vunpack.c.l.s4 1983009808
      %v1051 = vunpack.c.0.s8 %v1050
      %v1052 = vlaneseq
      %v1053 = vshrl.u32 %v1052, 7
      %v1054 = vsub.s32 %v1051, %v1053
      %v1055 = vrot.slane %v1041, %v1054
      %v1056 = vcombine.low %v1019, %v1029
      %v1057 = vcombine.high %v1019, %v1029
      %v1059 = vunpack.c.l.s4 1983009808
      %v1060 = vunpack.c.0.s8 %v1059
      %v1061 = vlaneseq
      %v1062 = vshrl.u32 %v1061, 7
      %v1063 = vsub.s32 %v1060, %v1062
      %v1064 = vrot.slane %v1056, %v1063
      %v1066 = vunpack.c.l.s4 1983009808
      %v1067 = vunpack.c.0.s8 %v1066
      %v1068 = vlaneseq
      %v1069 = vshrl.u32 %v1068, 7
      %v1070 = vsub.s32 %v1067, %v1069
      %v1071 = vrot.slane %v1057, %v1070
      %v1072 = vcombine.low %v1048, %v1064
      %v1073 = vcombine.high %v1048, %v1064
      %v1075 = vunpack.c.l.s4 1934713408
      %v1076 = vunpack.c.0.s8 %v1075
      %v1077 = vlaneseq
      %v1078 = vshrl.u32 %v1077, 7
      %v1079 = vsub.s32 %v1076, %v1078
      %v1080 = vrot.slane %v1072, %v1079
      %v1082 = vunpack.c.l.s4 1934713408
      %v1083 = vunpack.c.0.s8 %v1082
      %v1084 = vlaneseq
      %v1085 = vshrl.u32 %v1084, 7
      %v1086 = vsub.s32 %v1083, %v1085
      %v1087 = vrot.slane %v1073, %v1086
      %v1088 = vcombine.low %v1055, %v1071
      %v1089 = vcombine.high %v1055, %v1071
      %v1091 = vunpack.c.l.s4 1934713408
      %v1092 = vunpack.c.0.s8 %v1091
      %v1093 = vlaneseq
      %v1094 = vshrl.u32 %v1093, 7
      %v1095 = vsub.s32 %v1092, %v1094
      %v1096 = vrot.slane %v1088, %v1095
      %v1098 = vunpack.c.l.s4 1934713408
      %v1099 = vunpack.c.0.s8 %v1098
      %v1100 = vlaneseq
      %v1101 = vshrl.u32 %v1100, 7
      %v1102 = vsub.s32 %v1099, %v1101
      %v1103 = vrot.slane %v1089, %v1102
      %v1104 = vcombine.high %v1080, 0.0
      %v1105 = vcombine.high %v1087, 0.0
      %v1106 = vcombine.high %v1096, 0.0
      %v1107 = vcombine.high %v1103, 0.0
      %v1108 = vcombine.low %v1016, %v1026
      %v1109 = vcombine.high %v1016, %v1026
      %v1111 = vunpack.c.l.s4 1983009808
      %v1112 = vunpack.c.0.s8 %v1111
      %v1113 = vlaneseq
      %v1114 = vshrl.u32 %v1113, 7
      %v1115 = vsub.s32 %v1112, %v1114
      %v1116 = vrot.slane %v1108, %v1115
      %v1118 = vunpack.c.l.s4 1983009808
      %v1119 = vunpack.c.0.s8 %v1118
      %v1120 = vlaneseq
      %v1121 = vshrl.u32 %v1120, 7
      %v1122 = vsub.s32 %v1119, %v1121
      %v1123 = vrot.slane %v1109, %v1122
      %v1124 = vcombine.low %v1021, %v1031
      %v1125 = vcombine.high %v1021, %v1031
      %v1127 = vunpack.c.l.s4 1983009808
      %v1128 = vunpack.c.0.s8 %v1127
      %v1129 = vlaneseq
      %v1130 = vshrl.u32 %v1129, 7
      %v1131 = vsub.s32 %v1128, %v1130
      %v1132 = vrot.slane %v1124, %v1131
      %v1134 = vunpack.c.l.s4 1983009808
      %v1135 = vunpack.c.0.s8 %v1134
      %v1136 = vlaneseq
      %v1137 = vshrl.u32 %v1136, 7
      %v1138 = vsub.s32 %v1135, %v1137
      %v1139 = vrot.slane %v1125, %v1138
      %v1140 = vcombine.low %v1116, %v1132
      %v1141 = vcombine.high %v1116, %v1132
      %v1143 = vunpack.c.l.s4 1934713408
      %v1144 = vunpack.c.0.s8 %v1143
      %v1145 = vlaneseq
      %v1146 = vshrl.u32 %v1145, 7
      %v1147 = vsub.s32 %v1144, %v1146
      %v1148 = vrot.slane %v1140, %v1147
      %v1150 = vunpack.c.l.s4 1934713408
      %v1151 = vunpack.c.0.s8 %v1150
      %v1152 = vlaneseq
      %v1153 = vshrl.u32 %v1152, 7
      %v1154 = vsub.s32 %v1151, %v1153
      %v1155 = vrot.slane %v1141, %v1154
      %v1156 = vcombine.low %v1123, %v1139
      %v1157 = vcombine.high %v1123, %v1139
      %v1159 = vunpack.c.l.s4 1934713408
      %v1160 = vunpack.c.0.s8 %v1159
      %v1161 = vlaneseq
      %v1162 = vshrl.u32 %v1161, 7
      %v1163 = vsub.s32 %v1160, %v1162
      %v1164 = vrot.slane %v1156, %v1163
      %v1166 = vunpack.c.l.s4 1934713408
      %v1167 = vunpack.c.0.s8 %v1166
      %v1168 = vlaneseq
      %v1169 = vshrl.u32 %v1168, 7
      %v1170 = vsub.s32 %v1167, %v1169
      %v1171 = vrot.slane %v1157, %v1170
      %v1172 = vcombine.high %v1148, 0.0
      %v1173 = vcombine.high %v1155, 0.0
      %v1174 = vcombine.high %v1164, 0.0
      %v1175 = vcombine.high %v1171, 0.0
      %1177 = vrot.lane.b32.xlu0 %v1104, 16
      %v1178 = vpop.permute.xlu0 %1177
      %1181 = vrot.lane.b32.xlu0 %v1087, 32
      %v1182 = vpop.permute.xlu0 %1181
      %1185 = vrot.lane.b32.xlu0 %v1105, 48
      %v1186 = vpop.permute.xlu0 %1185
      %1189 = vrot.lane.b32.xlu0 %v1096, 64
      %v1190 = vpop.permute.xlu0 %1189
      %1193 = vrot.lane.b32.xlu0 %v1106, 80
      %v1194 = vpop.permute.xlu0 %1193
      %1197 = vrot.lane.b32.xlu0 %v1103, 96
      %v1198 = vpop.permute.xlu0 %1197
      %1201 = vrot.lane.b32.xlu0 %v1107, 112
      %v1202 = vpop.permute.xlu0 %1201
      %1205 = vrot.lane.b32.xlu0 %v1172, 16
      %v1206 = vpop.permute.xlu0 %1205
      %1209 = vrot.lane.b32.xlu0 %v1155, 32
      %v1210 = vpop.permute.xlu0 %1209
      %1213 = vrot.lane.b32.xlu0 %v1173, 48
      %v1214 = vpop.permute.xlu0 %1213
      %1217 = vrot.lane.b32.xlu0 %v1164, 64
      %v1218 = vpop.permute.xlu0 %1217
      %1221 = vrot.lane.b32.xlu0 %v1174, 80
      %v1222 = vpop.permute.xlu0 %1221
      %1225 = vrot.lane.b32.xlu0 %v1171, 96
      %v1226 = vpop.permute.xlu0 %1225
      %1229 = vrot.lane.b32.xlu0 %v1175, 112
      %v1230 = vpop.permute.xlu0 %1229
      %v1232 = vsel %vm518, %v1080, %v1178
      %v1233 = vsel %vm520, %v1232, %v1182
      %v1234 = vsel %vm522, %v1233, %v1186
      %v1235 = vsel %vm524, %v1234, %v1190
      %v1236 = vsel %vm526, %v1235, %v1194
      %v1237 = vsel %vm528, %v1236, %v1198
      %v1238 = vsel %vm530, %v1237, %v1202
      %v1239 = vsel %vm518, %v1148, %v1206
      %v1240 = vsel %vm520, %v1239, %v1210
      %v1241 = vsel %vm522, %v1240, %v1214
      %v1242 = vsel %vm524, %v1241, %v1218
      %v1243 = vsel %vm526, %v1242, %v1222
      %v1244 = vsel %vm528, %v1243, %v1226
      %v1245 = vsel %vm530, %v1244, %v1230
      %1246 = vrot.lane.b32.xlu0 %v1014, 127
      %v1247 = vpop.permute.xlu0 %1246
      %1248 = vrot.lane.b32.xlu0 %v1016, 127
      %v1249 = vpop.permute.xlu0 %1248
      %1250 = vrot.lane.b32.xlu0 %v1019, 127
      %v1251 = vpop.permute.xlu0 %1250
      %1252 = vrot.lane.b32.xlu0 %v1021, 127
      %v1253 = vpop.permute.xlu0 %1252
      %1254 = vrot.lane.b32.xlu0 %v1024, 127
      %v1255 = vpop.permute.xlu0 %1254
      %1256 = vrot.lane.b32.xlu0 %v1026, 127
      %v1257 = vpop.permute.xlu0 %1256
      %1258 = vrot.lane.b32.xlu0 %v1029, 127
      %v1259 = vpop.permute.xlu0 %1258
      %1260 = vrot.lane.b32.xlu0 %v1031, 127
      %v1261 = vpop.permute.xlu0 %1260
      %v1270 = vcombine.low %v1247, %v1255
      %v1271 = vcombine.high %v1247, %v1255
      %v1273 = vunpack.c.l.s4 1983009808
      %v1274 = vunpack.c.0.s8 %v1273
      %v1275 = vlaneseq
      %v1276 = vshrl.u32 %v1275, 7
      %v1277 = vsub.s32 %v1274, %v1276
      %v1278 = vrot.slane %v1270, %v1277
      %v1280 = vunpack.c.l.s4 1983009808
      %v1281 = vunpack.c.0.s8 %v1280
      %v1282 = vlaneseq
      %v1283 = vshrl.u32 %v1282, 7
      %v1284 = vsub.s32 %v1281, %v1283
      %v1285 = vrot.slane %v1271, %v1284
      %v1286 = vcombine.low %v1251, %v1259
      %v1287 = vcombine.high %v1251, %v1259
      %v1289 = vunpack.c.l.s4 1983009808
      %v1290 = vunpack.c.0.s8 %v1289
      %v1291 = vlaneseq
      %v1292 = vshrl.u32 %v1291, 7
      %v1293 = vsub.s32 %v1290, %v1292
      %v1294 = vrot.slane %v1286, %v1293
      %v1296 = vunpack.c.l.s4 1983009808
      %v1297 = vunpack.c.0.s8 %v1296
      %v1298 = vlaneseq
      %v1299 = vshrl.u32 %v1298, 7
      %v1300 = vsub.s32 %v1297, %v1299
      %v1301 = vrot.slane %v1287, %v1300
      %v1302 = vcombine.low %v1278, %v1294
      %v1303 = vcombine.high %v1278, %v1294
      %v1305 = vunpack.c.l.s4 1934713408
      %v1306 = vunpack.c.0.s8 %v1305
      %v1307 = vlaneseq
      %v1308 = vshrl.u32 %v1307, 7
      %v1309 = vsub.s32 %v1306, %v1308
      %v1310 = vrot.slane %v1302, %v1309
      %v1312 = vunpack.c.l.s4 1934713408
      %v1313 = vunpack.c.0.s8 %v1312
      %v1314 = vlaneseq
      %v1315 = vshrl.u32 %v1314, 7
      %v1316 = vsub.s32 %v1313, %v1315
      %v1317 = vrot.slane %v1303, %v1316
      %v1318 = vcombine.low %v1285, %v1301
      %v1319 = vcombine.high %v1285, %v1301
      %v1321 = vunpack.c.l.s4 1934713408
      %v1322 = vunpack.c.0.s8 %v1321
      %v1323 = vlaneseq
      %v1324 = vshrl.u32 %v1323, 7
      %v1325 = vsub.s32 %v1322, %v1324
      %v1326 = vrot.slane %v1318, %v1325
      %v1328 = vunpack.c.l.s4 1934713408
      %v1329 = vunpack.c.0.s8 %v1328
      %v1330 = vlaneseq
      %v1331 = vshrl.u32 %v1330, 7
      %v1332 = vsub.s32 %v1329, %v1331
      %v1333 = vrot.slane %v1319, %v1332
      %v1334 = vcombine.high %v1310, 0.0
      %v1335 = vcombine.high %v1317, 0.0
      %v1336 = vcombine.high %v1326, 0.0
      %v1337 = vcombine.high %v1333, 0.0
      %v1338 = vcombine.low %v1249, %v1257
      %v1339 = vcombine.high %v1249, %v1257
      %v1341 = vunpack.c.l.s4 1983009808
      %v1342 = vunpack.c.0.s8 %v1341
      %v1343 = vlaneseq
      %v1344 = vshrl.u32 %v1343, 7
      %v1345 = vsub.s32 %v1342, %v1344
      %v1346 = vrot.slane %v1338, %v1345
      %v1348 = vunpack.c.l.s4 1983009808
      %v1349 = vunpack.c.0.s8 %v1348
      %v1350 = vlaneseq
      %v1351 = vshrl.u32 %v1350, 7
      %v1352 = vsub.s32 %v1349, %v1351
      %v1353 = vrot.slane %v1339, %v1352
      %v1354 = vcombine.low %v1253, %v1261
      %v1355 = vcombine.high %v1253, %v1261
      %v1357 = vunpack.c.l.s4 1983009808
      %v1358 = vunpack.c.0.s8 %v1357
      %v1359 = vlaneseq
      %v1360 = vshrl.u32 %v1359, 7
      %v1361 = vsub.s32 %v1358, %v1360
      %v1362 = vrot.slane %v1354, %v1361
      %v1364 = vunpack.c.l.s4 1983009808
      %v1365 = vunpack.c.0.s8 %v1364
      %v1366 = vlaneseq
      %v1367 = vshrl.u32 %v1366, 7
      %v1368 = vsub.s32 %v1365, %v1367
      %v1369 = vrot.slane %v1355, %v1368
      %v1370 = vcombine.low %v1346, %v1362
      %v1371 = vcombine.high %v1346, %v1362
      %v1373 = vunpack.c.l.s4 1934713408
      %v1374 = vunpack.c.0.s8 %v1373
      %v1375 = vlaneseq
      %v1376 = vshrl.u32 %v1375, 7
      %v1377 = vsub.s32 %v1374, %v1376
      %v1378 = vrot.slane %v1370, %v1377
      %v1380 = vunpack.c.l.s4 1934713408
      %v1381 = vunpack.c.0.s8 %v1380
      %v1382 = vlaneseq
      %v1383 = vshrl.u32 %v1382, 7
      %v1384 = vsub.s32 %v1381, %v1383
      %v1385 = vrot.slane %v1371, %v1384
      %v1386 = vcombine.low %v1353, %v1369
      %v1387 = vcombine.high %v1353, %v1369
      %v1389 = vunpack.c.l.s4 1934713408
      %v1390 = vunpack.c.0.s8 %v1389
      %v1391 = vlaneseq
      %v1392 = vshrl.u32 %v1391, 7
      %v1393 = vsub.s32 %v1390, %v1392
      %v1394 = vrot.slane %v1386, %v1393
      %v1396 = vunpack.c.l.s4 1934713408
      %v1397 = vunpack.c.0.s8 %v1396
      %v1398 = vlaneseq
      %v1399 = vshrl.u32 %v1398, 7
      %v1400 = vsub.s32 %v1397, %v1399
      %v1401 = vrot.slane %v1387, %v1400
      %v1402 = vcombine.high %v1378, 0.0
      %v1403 = vcombine.high %v1385, 0.0
      %v1404 = vcombine.high %v1394, 0.0
      %v1405 = vcombine.high %v1401, 0.0
      %1407 = vrot.lane.b32.xlu0 %v1334, 16
      %v1408 = vpop.permute.xlu0 %1407
      %1411 = vrot.lane.b32.xlu0 %v1317, 32
      %v1412 = vpop.permute.xlu0 %1411
      %1415 = vrot.lane.b32.xlu0 %v1335, 48
      %v1416 = vpop.permute.xlu0 %1415
      %1419 = vrot.lane.b32.xlu0 %v1326, 64
      %v1420 = vpop.permute.xlu0 %1419
      %1423 = vrot.lane.b32.xlu0 %v1336, 80
      %v1424 = vpop.permute.xlu0 %1423
      %1427 = vrot.lane.b32.xlu0 %v1333, 96
      %v1428 = vpop.permute.xlu0 %1427
      %1431 = vrot.lane.b32.xlu0 %v1337, 112
      %v1432 = vpop.permute.xlu0 %1431
      %1435 = vrot.lane.b32.xlu0 %v1402, 16
      %v1436 = vpop.permute.xlu0 %1435
      %1439 = vrot.lane.b32.xlu0 %v1385, 32
      %v1440 = vpop.permute.xlu0 %1439
      %1443 = vrot.lane.b32.xlu0 %v1403, 48
      %v1444 = vpop.permute.xlu0 %1443
      %1447 = vrot.lane.b32.xlu0 %v1394, 64
      %v1448 = vpop.permute.xlu0 %1447
      %1451 = vrot.lane.b32.xlu0 %v1404, 80
      %v1452 = vpop.permute.xlu0 %1451
      %1455 = vrot.lane.b32.xlu0 %v1401, 96
      %v1456 = vpop.permute.xlu0 %1455
      %1459 = vrot.lane.b32.xlu0 %v1405, 112
      %v1460 = vpop.permute.xlu0 %1459
      %v1462 = vsel %vm518, %v1310, %v1408
      %v1463 = vsel %vm520, %v1462, %v1412
      %v1464 = vsel %vm522, %v1463, %v1416
      %v1465 = vsel %vm524, %v1464, %v1420
      %v1466 = vsel %vm526, %v1465, %v1424
      %v1467 = vsel %vm528, %v1466, %v1428
      %v1468 = vsel %vm530, %v1467, %v1432
      %v1469 = vsel %vm518, %v1378, %v1436
      %v1470 = vsel %vm520, %v1469, %v1440
      %v1471 = vsel %vm522, %v1470, %v1444
      %v1472 = vsel %vm524, %v1471, %v1448
      %v1473 = vsel %vm526, %v1472, %v1452
      %v1474 = vsel %vm528, %v1473, %v1456
      %v1475 = vsel %vm530, %v1474, %v1460
      %1476 = vrot.lane.b32.xlu0 %v1014, 126
      %v1477 = vpop.permute.xlu0 %1476
      %1478 = vrot.lane.b32.xlu0 %v1016, 126
      %v1479 = vpop.permute.xlu0 %1478
      %1480 = vrot.lane.b32.xlu0 %v1019, 126
      %v1481 = vpop.permute.xlu0 %1480
      %1482 = vrot.lane.b32.xlu0 %v1021, 126
      %v1483 = vpop.permute.xlu0 %1482
      %1484 = vrot.lane.b32.xlu0 %v1024, 126
      %v1485 = vpop.permute.xlu0 %1484
      %1486 = vrot.lane.b32.xlu0 %v1026, 126
      %v1487 = vpop.permute.xlu0 %1486
      %1488 = vrot.lane.b32.xlu0 %v1029, 126
      %v1489 = vpop.permute.xlu0 %1488
      %1490 = vrot.lane.b32.xlu0 %v1031, 126
      %v1491 = vpop.permute.xlu0 %1490
      %v1500 = vcombine.low %v1477, %v1485
      %v1501 = vcombine.high %v1477, %v1485
      %v1503 = vunpack.c.l.s4 1983009808
      %v1504 = vunpack.c.0.s8 %v1503
      %v1505 = vlaneseq
      %v1506 = vshrl.u32 %v1505, 7
      %v1507 = vsub.s32 %v1504, %v1506
      %v1508 = vrot.slane %v1500, %v1507
      %v1510 = vunpack.c.l.s4 1983009808
      %v1511 = vunpack.c.0.s8 %v1510
      %v1512 = vlaneseq
      %v1513 = vshrl.u32 %v1512, 7
      %v1514 = vsub.s32 %v1511, %v1513
      %v1515 = vrot.slane %v1501, %v1514
      %v1516 = vcombine.low %v1481, %v1489
      %v1517 = vcombine.high %v1481, %v1489
      %v1519 = vunpack.c.l.s4 1983009808
      %v1520 = vunpack.c.0.s8 %v1519
      %v1521 = vlaneseq
      %v1522 = vshrl.u32 %v1521, 7
      %v1523 = vsub.s32 %v1520, %v1522
      %v1524 = vrot.slane %v1516, %v1523
      %v1526 = vunpack.c.l.s4 1983009808
      %v1527 = vunpack.c.0.s8 %v1526
      %v1528 = vlaneseq
      %v1529 = vshrl.u32 %v1528, 7
      %v1530 = vsub.s32 %v1527, %v1529
      %v1531 = vrot.slane %v1517, %v1530
      %v1532 = vcombine.low %v1508, %v1524
      %v1533 = vcombine.high %v1508, %v1524
      %v1535 = vunpack.c.l.s4 1934713408
      %v1536 = vunpack.c.0.s8 %v1535
      %v1537 = vlaneseq
      %v1538 = vshrl.u32 %v1537, 7
      %v1539 = vsub.s32 %v1536, %v1538
      %v1540 = vrot.slane %v1532, %v1539
      %v1542 = vunpack.c.l.s4 1934713408
      %v1543 = vunpack.c.0.s8 %v1542
      %v1544 = vlaneseq
      %v1545 = vshrl.u32 %v1544, 7
      %v1546 = vsub.s32 %v1543, %v1545
      %v1547 = vrot.slane %v1533, %v1546
      %v1548 = vcombine.low %v1515, %v1531
      %v1549 = vcombine.high %v1515, %v1531
      %v1551 = vunpack.c.l.s4 1934713408
      %v1552 = vunpack.c.0.s8 %v1551
      %v1553 = vlaneseq
      %v1554 = vshrl.u32 %v1553, 7
      %v1555 = vsub.s32 %v1552, %v1554
      %v1556 = vrot.slane %v1548, %v1555
      %v1558 = vunpack.c.l.s4 1934713408
      %v1559 = vunpack.c.0.s8 %v1558
      %v1560 = vlaneseq
      %v1561 = vshrl.u32 %v1560, 7
      %v1562 = vsub.s32 %v1559, %v1561
      %v1563 = vrot.slane %v1549, %v1562
      %v1564 = vcombine.high %v1540, 0.0
      %v1565 = vcombine.high %v1547, 0.0
      %v1566 = vcombine.high %v1556, 0.0
      %v1567 = vcombine.high %v1563, 0.0
      %v1568 = vcombine.low %v1479, %v1487
      %v1569 = vcombine.high %v1479, %v1487
      %v1571 = vunpack.c.l.s4 1983009808
      %v1572 = vunpack.c.0.s8 %v1571
      %v1573 = vlaneseq
      %v1574 = vshrl.u32 %v1573, 7
      %v1575 = vsub.s32 %v1572, %v1574
      %v1576 = vrot.slane %v1568, %v1575
      %v1578 = vunpack.c.l.s4 1983009808
      %v1579 = vunpack.c.0.s8 %v1578
      %v1580 = vlaneseq
      %v1581 = vshrl.u32 %v1580, 7
      %v1582 = vsub.s32 %v1579, %v1581
      %v1583 = vrot.slane %v1569, %v1582
      %v1584 = vcombine.low %v1483, %v1491
      %v1585 = vcombine.high %v1483, %v1491
      %v1587 = vunpack.c.l.s4 1983009808
      %v1588 = vunpack.c.0.s8 %v1587
      %v1589 = vlaneseq
      %v1590 = vshrl.u32 %v1589, 7
      %v1591 = vsub.s32 %v1588, %v1590
      %v1592 = vrot.slane %v1584, %v1591
      %v1594 = vunpack.c.l.s4 1983009808
      %v1595 = vunpack.c.0.s8 %v1594
      %v1596 = vlaneseq
      %v1597 = vshrl.u32 %v1596, 7
      %v1598 = vsub.s32 %v1595, %v1597
      %v1599 = vrot.slane %v1585, %v1598
      %v1600 = vcombine.low %v1576, %v1592
      %v1601 = vcombine.high %v1576, %v1592
      %v1603 = vunpack.c.l.s4 1934713408
      %v1604 = vunpack.c.0.s8 %v1603
      %v1605 = vlaneseq
      %v1606 = vshrl.u32 %v1605, 7
      %v1607 = vsub.s32 %v1604, %v1606
      %v1608 = vrot.slane %v1600, %v1607
      %v1610 = vunpack.c.l.s4 1934713408
      %v1611 = vunpack.c.0.s8 %v1610
      %v1612 = vlaneseq
      %v1613 = vshrl.u32 %v1612, 7
      %v1614 = vsub.s32 %v1611, %v1613
      %v1615 = vrot.slane %v1601, %v1614
      %v1616 = vcombine.low %v1583, %v1599
      %v1617 = vcombine.high %v1583, %v1599
      %v1619 = vunpack.c.l.s4 1934713408
      %v1620 = vunpack.c.0.s8 %v1619
      %v1621 = vlaneseq
      %v1622 = vshrl.u32 %v1621, 7
      %v1623 = vsub.s32 %v1620, %v1622
      %v1624 = vrot.slane %v1616, %v1623
      %v1626 = vunpack.c.l.s4 1934713408
      %v1627 = vunpack.c.0.s8 %v1626
      %v1628 = vlaneseq
      %v1629 = vshrl.u32 %v1628, 7
      %v1630 = vsub.s32 %v1627, %v1629
      %v1631 = vrot.slane %v1617, %v1630
      %v1632 = vcombine.high %v1608, 0.0
      %v1633 = vcombine.high %v1615, 0.0
      %v1634 = vcombine.high %v1624, 0.0
      %v1635 = vcombine.high %v1631, 0.0
      %1637 = vrot.lane.b32.xlu0 %v1564, 16
      %v1638 = vpop.permute.xlu0 %1637
      %1641 = vrot.lane.b32.xlu0 %v1547, 32
      %v1642 = vpop.permute.xlu0 %1641
      %1645 = vrot.lane.b32.xlu0 %v1565, 48
      %v1646 = vpop.permute.xlu0 %1645
      %1649 = vrot.lane.b32.xlu0 %v1556, 64
      %v1650 = vpop.permute.xlu0 %1649
      %1653 = vrot.lane.b32.xlu0 %v1566, 80
      %v1654 = vpop.permute.xlu0 %1653
      %1657 = vrot.lane.b32.xlu0 %v1563, 96
      %v1658 = vpop.permute.xlu0 %1657
      %1661 = vrot.lane.b32.xlu0 %v1567, 112
      %v1662 = vpop.permute.xlu0 %1661
      %1665 = vrot.lane.b32.xlu0 %v1632, 16
      %v1666 = vpop.permute.xlu0 %1665
      %1669 = vrot.lane.b32.xlu0 %v1615, 32
      %v1670 = vpop.permute.xlu0 %1669
      %1673 = vrot.lane.b32.xlu0 %v1633, 48
      %v1674 = vpop.permute.xlu0 %1673
      %1677 = vrot.lane.b32.xlu0 %v1624, 64
      %v1678 = vpop.permute.xlu0 %1677
      %1681 = vrot.lane.b32.xlu0 %v1634, 80
      %v1682 = vpop.permute.xlu0 %1681
      %1685 = vrot.lane.b32.xlu0 %v1631, 96
      %v1686 = vpop.permute.xlu0 %1685
      %1689 = vrot.lane.b32.xlu0 %v1635, 112
      %v1690 = vpop.permute.xlu0 %1689
      %v1692 = vsel %vm518, %v1540, %v1638
      %v1693 = vsel %vm520, %v1692, %v1642
      %v1694 = vsel %vm522, %v1693, %v1646
      %v1695 = vsel %vm524, %v1694, %v1650
      %v1696 = vsel %vm526, %v1695, %v1654
      %v1697 = vsel %vm528, %v1696, %v1658
      %v1698 = vsel %vm530, %v1697, %v1662
      %v1699 = vsel %vm518, %v1608, %v1666
      %v1700 = vsel %vm520, %v1699, %v1670
      %v1701 = vsel %vm522, %v1700, %v1674
      %v1702 = vsel %vm524, %v1701, %v1678
      %v1703 = vsel %vm526, %v1702, %v1682
      %v1704 = vsel %vm528, %v1703, %v1686
      %v1705 = vsel %vm530, %v1704, %v1690
      %vm1706 = vcmask 1045504
      %v1707 = vrot.slane %v314, 2
      %v1708 = vrot.slane %v315, 2
      %v1709 = vsel %vm1706, %v1707, %v1708
      %v1710 = vrot.slane %v316, 2
      %v1711 = vsel %vm1706, %v1708, %v1710
      %v1712 = vrot.slane %v317, 2
      %v1713 = vrot.slane %v318, 2
      %v1714 = vsel %vm1706, %v1712, %v1713
      %v1715 = vrot.slane %v319, 2
      %v1716 = vsel %vm1706, %v1713, %v1715
      %v1717 = vrot.slane %v320, 2
      %v1718 = vrot.slane %v321, 2
      %v1719 = vsel %vm1706, %v1717, %v1718
      %v1720 = vrot.slane %v322, 2
      %v1721 = vsel %vm1706, %v1718, %v1720
      %v1722 = vrot.slane %v323, 2
      %v1723 = vrot.slane %v324, 2
      %v1724 = vsel %vm1706, %v1722, %v1723
      %v1725 = vrot.slane %v325, 2
      %v1726 = vsel %vm1706, %v1723, %v1725
      %v1735 = vcombine.low %v1709, %v1719
      %v1736 = vcombine.high %v1709, %v1719
      %v1738 = vunpack.c.l.s4 1983009808
      %v1739 = vunpack.c.0.s8 %v1738
      %v1740 = vlaneseq
      %v1741 = vshrl.u32 %v1740, 7
      %v1742 = vsub.s32 %v1739, %v1741
      %v1743 = vrot.slane %v1735, %v1742
      %v1745 = vunpack.c.l.s4 1983009808
      %v1746 = vunpack.c.0.s8 %v1745
      %v1747 = vlaneseq
      %v1748 = vshrl.u32 %v1747, 7
      %v1749 = vsub.s32 %v1746, %v1748
      %v1750 = vrot.slane %v1736, %v1749
      %v1751 = vcombine.low %v1714, %v1724
      %v1752 = vcombine.high %v1714, %v1724
      %v1754 = vunpack.c.l.s4 1983009808
      %v1755 = vunpack.c.0.s8 %v1754
      %v1756 = vlaneseq
      %v1757 = vshrl.u32 %v1756, 7
      %v1758 = vsub.s32 %v1755, %v1757
      %v1759 = vrot.slane %v1751, %v1758
      %v1761 = vunpack.c.l.s4 1983009808
      %v1762 = vunpack.c.0.s8 %v1761
      %v1763 = vlaneseq
      %v1764 = vshrl.u32 %v1763, 7
      %v1765 = vsub.s32 %v1762, %v1764
      %v1766 = vrot.slane %v1752, %v1765
      %v1767 = vcombine.low %v1743, %v1759
      %v1768 = vcombine.high %v1743, %v1759
      %v1770 = vunpack.c.l.s4 1934713408
      %v1771 = vunpack.c.0.s8 %v1770
      %v1772 = vlaneseq
      %v1773 = vshrl.u32 %v1772, 7
      %v1774 = vsub.s32 %v1771, %v1773
      %v1775 = vrot.slane %v1767, %v1774
      %v1777 = vunpack.c.l.s4 1934713408
      %v1778 = vunpack.c.0.s8 %v1777
      %v1779 = vlaneseq
      %v1780 = vshrl.u32 %v1779, 7
      %v1781 = vsub.s32 %v1778, %v1780
      %v1782 = vrot.slane %v1768, %v1781
      %v1783 = vcombine.low %v1750, %v1766
      %v1784 = vcombine.high %v1750, %v1766
      %v1786 = vunpack.c.l.s4 1934713408
      %v1787 = vunpack.c.0.s8 %v1786
      %v1788 = vlaneseq
      %v1789 = vshrl.u32 %v1788, 7
      %v1790 = vsub.s32 %v1787, %v1789
      %v1791 = vrot.slane %v1783, %v1790
      %v1793 = vunpack.c.l.s4 1934713408
      %v1794 = vunpack.c.0.s8 %v1793
      %v1795 = vlaneseq
      %v1796 = vshrl.u32 %v1795, 7
      %v1797 = vsub.s32 %v1794, %v1796
      %v1798 = vrot.slane %v1784, %v1797
      %v1799 = vcombine.high %v1775, 0.0
      %v1800 = vcombine.high %v1782, 0.0
      %v1801 = vcombine.high %v1791, 0.0
      %v1802 = vcombine.high %v1798, 0.0
      %v1803 = vcombine.low %v1711, %v1721
      %v1804 = vcombine.high %v1711, %v1721
      %v1806 = vunpack.c.l.s4 1983009808
      %v1807 = vunpack.c.0.s8 %v1806
      %v1808 = vlaneseq
      %v1809 = vshrl.u32 %v1808, 7
      %v1810 = vsub.s32 %v1807, %v1809
      %v1811 = vrot.slane %v1803, %v1810
      %v1813 = vunpack.c.l.s4 1983009808
      %v1814 = vunpack.c.0.s8 %v1813
      %v1815 = vlaneseq
      %v1816 = vshrl.u32 %v1815, 7
      %v1817 = vsub.s32 %v1814, %v1816
      %v1818 = vrot.slane %v1804, %v1817
      %v1819 = vcombine.low %v1716, %v1726
      %v1820 = vcombine.high %v1716, %v1726
      %v1822 = vunpack.c.l.s4 1983009808
      %v1823 = vunpack.c.0.s8 %v1822
      %v1824 = vlaneseq
      %v1825 = vshrl.u32 %v1824, 7
      %v1826 = vsub.s32 %v1823, %v1825
      %v1827 = vrot.slane %v1819, %v1826
      %v1829 = vunpack.c.l.s4 1983009808
      %v1830 = vunpack.c.0.s8 %v1829
      %v1831 = vlaneseq
      %v1832 = vshrl.u32 %v1831, 7
      %v1833 = vsub.s32 %v1830, %v1832
      %v1834 = vrot.slane %v1820, %v1833
      %v1835 = vcombine.low %v1811, %v1827
      %v1836 = vcombine.high %v1811, %v1827
      %v1838 = vunpack.c.l.s4 1934713408
      %v1839 = vunpack.c.0.s8 %v1838
      %v1840 = vlaneseq
      %v1841 = vshrl.u32 %v1840, 7
      %v1842 = vsub.s32 %v1839, %v1841
      %v1843 = vrot.slane %v1835, %v1842
      %v1845 = vunpack.c.l.s4 1934713408
      %v1846 = vunpack.c.0.s8 %v1845
      %v1847 = vlaneseq
      %v1848 = vshrl.u32 %v1847, 7
      %v1849 = vsub.s32 %v1846, %v1848
      %v1850 = vrot.slane %v1836, %v1849
      %v1851 = vcombine.low %v1818, %v1834
      %v1852 = vcombine.high %v1818, %v1834
      %v1854 = vunpack.c.l.s4 1934713408
      %v1855 = vunpack.c.0.s8 %v1854
      %v1856 = vlaneseq
      %v1857 = vshrl.u32 %v1856, 7
      %v1858 = vsub.s32 %v1855, %v1857
      %v1859 = vrot.slane %v1851, %v1858
      %v1861 = vunpack.c.l.s4 1934713408
      %v1862 = vunpack.c.0.s8 %v1861
      %v1863 = vlaneseq
      %v1864 = vshrl.u32 %v1863, 7
      %v1865 = vsub.s32 %v1862, %v1864
      %v1866 = vrot.slane %v1852, %v1865
      %v1867 = vcombine.high %v1843, 0.0
      %v1868 = vcombine.high %v1850, 0.0
      %v1869 = vcombine.high %v1859, 0.0
      %v1870 = vcombine.high %v1866, 0.0
      %1872 = vrot.lane.b32.xlu0 %v1799, 16
      %v1873 = vpop.permute.xlu0 %1872
      %1876 = vrot.lane.b32.xlu0 %v1782, 32
      %v1877 = vpop.permute.xlu0 %1876
      %1880 = vrot.lane.b32.xlu0 %v1800, 48
      %v1881 = vpop.permute.xlu0 %1880
      %1884 = vrot.lane.b32.xlu0 %v1791, 64
      %v1885 = vpop.permute.xlu0 %1884
      %1888 = vrot.lane.b32.xlu0 %v1801, 80
      %v1889 = vpop.permute.xlu0 %1888
      %1892 = vrot.lane.b32.xlu0 %v1798, 96
      %v1893 = vpop.permute.xlu0 %1892
      %1896 = vrot.lane.b32.xlu0 %v1802, 112
      %v1897 = vpop.permute.xlu0 %1896
      %1900 = vrot.lane.b32.xlu0 %v1867, 16
      %v1901 = vpop.permute.xlu0 %1900
      %1904 = vrot.lane.b32.xlu0 %v1850, 32
      %v1905 = vpop.permute.xlu0 %1904
      %1908 = vrot.lane.b32.xlu0 %v1868, 48
      %v1909 = vpop.permute.xlu0 %1908
      %1912 = vrot.lane.b32.xlu0 %v1859, 64
      %v1913 = vpop.permute.xlu0 %1912
      %1916 = vrot.lane.b32.xlu0 %v1869, 80
      %v1917 = vpop.permute.xlu0 %1916
      %1920 = vrot.lane.b32.xlu0 %v1866, 96
      %v1921 = vpop.permute.xlu0 %1920
      %1924 = vrot.lane.b32.xlu0 %v1870, 112
      %v1925 = vpop.permute.xlu0 %1924
      %v1927 = vsel %vm518, %v1775, %v1873
      %v1928 = vsel %vm520, %v1927, %v1877
      %v1929 = vsel %vm522, %v1928, %v1881
      %v1930 = vsel %vm524, %v1929, %v1885
      %v1931 = vsel %vm526, %v1930, %v1889
      %v1932 = vsel %vm528, %v1931, %v1893
      %v1933 = vsel %vm530, %v1932, %v1897
      %v1934 = vsel %vm518, %v1843, %v1901
      %v1935 = vsel %vm520, %v1934, %v1905
      %v1936 = vsel %vm522, %v1935, %v1909
      %v1937 = vsel %vm524, %v1936, %v1913
      %v1938 = vsel %vm526, %v1937, %v1917
      %v1939 = vsel %vm528, %v1938, %v1921
      %v1940 = vsel %vm530, %v1939, %v1925
      %1941 = vrot.lane.b32.xlu0 %v1709, 127
      %v1942 = vpop.permute.xlu0 %1941
      %1943 = vrot.lane.b32.xlu0 %v1711, 127
      %v1944 = vpop.permute.xlu0 %1943
      %1945 = vrot.lane.b32.xlu0 %v1714, 127
      %v1946 = vpop.permute.xlu0 %1945
      %1947 = vrot.lane.b32.xlu0 %v1716, 127
      %v1948 = vpop.permute.xlu0 %1947
      %1949 = vrot.lane.b32.xlu0 %v1719, 127
      %v1950 = vpop.permute.xlu0 %1949
      %1951 = vrot.lane.b32.xlu0 %v1721, 127
      %v1952 = vpop.permute.xlu0 %1951
      %1953 = vrot.lane.b32.xlu0 %v1724, 127
      %v1954 = vpop.permute.xlu0 %1953
      %1955 = vrot.lane.b32.xlu0 %v1726, 127
      %v1956 = vpop.permute.xlu0 %1955
      %v1965 = vcombine.low %v1942, %v1950
      %v1966 = vcombine.high %v1942, %v1950
      %v1968 = vunpack.c.l.s4 1983009808
      %v1969 = vunpack.c.0.s8 %v1968
      %v1970 = vlaneseq
      %v1971 = vshrl.u32 %v1970, 7
      %v1972 = vsub.s32 %v1969, %v1971
      %v1973 = vrot.slane %v1965, %v1972
      %v1975 = vunpack.c.l.s4 1983009808
      %v1976 = vunpack.c.0.s8 %v1975
      %v1977 = vlaneseq
      %v1978 = vshrl.u32 %v1977, 7
      %v1979 = vsub.s32 %v1976, %v1978
      %v1980 = vrot.slane %v1966, %v1979
      %v1981 = vcombine.low %v1946, %v1954
      %v1982 = vcombine.high %v1946, %v1954
      %v1984 = vunpack.c.l.s4 1983009808
      %v1985 = vunpack.c.0.s8 %v1984
      %v1986 = vlaneseq
      %v1987 = vshrl.u32 %v1986, 7
      %v1988 = vsub.s32 %v1985, %v1987
      %v1989 = vrot.slane %v1981, %v1988
      %v1991 = vunpack.c.l.s4 1983009808
      %v1992 = vunpack.c.0.s8 %v1991
      %v1993 = vlaneseq
      %v1994 = vshrl.u32 %v1993, 7
      %v1995 = vsub.s32 %v1992, %v1994
      %v1996 = vrot.slane %v1982, %v1995
      %v1997 = vcombine.low %v1973, %v1989
      %v1998 = vcombine.high %v1973, %v1989
      %v2000 = vunpack.c.l.s4 1934713408
      %v2001 = vunpack.c.0.s8 %v2000
      %v2002 = vlaneseq
      %v2003 = vshrl.u32 %v2002, 7
      %v2004 = vsub.s32 %v2001, %v2003
      %v2005 = vrot.slane %v1997, %v2004
      %v2007 = vunpack.c.l.s4 1934713408
      %v2008 = vunpack.c.0.s8 %v2007
      %v2009 = vlaneseq
      %v2010 = vshrl.u32 %v2009, 7
      %v2011 = vsub.s32 %v2008, %v2010
      %v2012 = vrot.slane %v1998, %v2011
      %v2013 = vcombine.low %v1980, %v1996
      %v2014 = vcombine.high %v1980, %v1996
      %v2016 = vunpack.c.l.s4 1934713408
      %v2017 = vunpack.c.0.s8 %v2016
      %v2018 = vlaneseq
      %v2019 = vshrl.u32 %v2018, 7
      %v2020 = vsub.s32 %v2017, %v2019
      %v2021 = vrot.slane %v2013, %v2020
      %v2023 = vunpack.c.l.s4 1934713408
      %v2024 = vunpack.c.0.s8 %v2023
      %v2025 = vlaneseq
      %v2026 = vshrl.u32 %v2025, 7
      %v2027 = vsub.s32 %v2024, %v2026
      %v2028 = vrot.slane %v2014, %v2027
      %v2029 = vcombine.high %v2005, 0.0
      %v2030 = vcombine.high %v2012, 0.0
      %v2031 = vcombine.high %v2021, 0.0
      %v2032 = vcombine.high %v2028, 0.0
      %v2033 = vcombine.low %v1944, %v1952
      %v2034 = vcombine.high %v1944, %v1952
      %v2036 = vunpack.c.l.s4 1983009808
      %v2037 = vunpack.c.0.s8 %v2036
      %v2038 = vlaneseq
      %v2039 = vshrl.u32 %v2038, 7
      %v2040 = vsub.s32 %v2037, %v2039
      %v2041 = vrot.slane %v2033, %v2040
      %v2043 = vunpack.c.l.s4 1983009808
      %v2044 = vunpack.c.0.s8 %v2043
      %v2045 = vlaneseq
      %v2046 = vshrl.u32 %v2045, 7
      %v2047 = vsub.s32 %v2044, %v2046
      %v2048 = vrot.slane %v2034, %v2047
      %v2049 = vcombine.low %v1948, %v1956
      %v2050 = vcombine.high %v1948, %v1956
      %v2052 = vunpack.c.l.s4 1983009808
      %v2053 = vunpack.c.0.s8 %v2052
      %v2054 = vlaneseq
      %v2055 = vshrl.u32 %v2054, 7
      %v2056 = vsub.s32 %v2053, %v2055
      %v2057 = vrot.slane %v2049, %v2056
      %v2059 = vunpack.c.l.s4 1983009808
      %v2060 = vunpack.c.0.s8 %v2059
      %v2061 = vlaneseq
      %v2062 = vshrl.u32 %v2061, 7
      %v2063 = vsub.s32 %v2060, %v2062
      %v2064 = vrot.slane %v2050, %v2063
      %v2065 = vcombine.low %v2041, %v2057
      %v2066 = vcombine.high %v2041, %v2057
      %v2068 = vunpack.c.l.s4 1934713408
      %v2069 = vunpack.c.0.s8 %v2068
      %v2070 = vlaneseq
      %v2071 = vshrl.u32 %v2070, 7
      %v2072 = vsub.s32 %v2069, %v2071
      %v2073 = vrot.slane %v2065, %v2072
      %v2075 = vunpack.c.l.s4 1934713408
      %v2076 = vunpack.c.0.s8 %v2075
      %v2077 = vlaneseq
      %v2078 = vshrl.u32 %v2077, 7
      %v2079 = vsub.s32 %v2076, %v2078
      %v2080 = vrot.slane %v2066, %v2079
      %v2081 = vcombine.low %v2048, %v2064
      %v2082 = vcombine.high %v2048, %v2064
      %v2084 = vunpack.c.l.s4 1934713408
      %v2085 = vunpack.c.0.s8 %v2084
      %v2086 = vlaneseq
      %v2087 = vshrl.u32 %v2086, 7
      %v2088 = vsub.s32 %v2085, %v2087
      %v2089 = vrot.slane %v2081, %v2088
      %v2091 = vunpack.c.l.s4 1934713408
      %v2092 = vunpack.c.0.s8 %v2091
      %v2093 = vlaneseq
      %v2094 = vshrl.u32 %v2093, 7
      %v2095 = vsub.s32 %v2092, %v2094
      %v2096 = vrot.slane %v2082, %v2095
      %v2097 = vcombine.high %v2073, 0.0
      %v2098 = vcombine.high %v2080, 0.0
      %v2099 = vcombine.high %v2089, 0.0
      %v2100 = vcombine.high %v2096, 0.0
      %2102 = vrot.lane.b32.xlu0 %v2029, 16
      %v2103 = vpop.permute.xlu0 %2102
      %2106 = vrot.lane.b32.xlu0 %v2012, 32
      %v2107 = vpop.permute.xlu0 %2106
      %2110 = vrot.lane.b32.xlu0 %v2030, 48
      %v2111 = vpop.permute.xlu0 %2110
      %2114 = vrot.lane.b32.xlu0 %v2021, 64
      %v2115 = vpop.permute.xlu0 %2114
      %2118 = vrot.lane.b32.xlu0 %v2031, 80
      %v2119 = vpop.permute.xlu0 %2118
      %2122 = vrot.lane.b32.xlu0 %v2028, 96
      %v2123 = vpop.permute.xlu0 %2122
      %2126 = vrot.lane.b32.xlu0 %v2032, 112
      %v2127 = vpop.permute.xlu0 %2126
      %2130 = vrot.lane.b32.xlu0 %v2097, 16
      %v2131 = vpop.permute.xlu0 %2130
      %2134 = vrot.lane.b32.xlu0 %v2080, 32
      %v2135 = vpop.permute.xlu0 %2134
      %2138 = vrot.lane.b32.xlu0 %v2098, 48
      %v2139 = vpop.permute.xlu0 %2138
      %2142 = vrot.lane.b32.xlu0 %v2089, 64
      %v2143 = vpop.permute.xlu0 %2142
      %2146 = vrot.lane.b32.xlu0 %v2099, 80
      %v2147 = vpop.permute.xlu0 %2146
      %2150 = vrot.lane.b32.xlu0 %v2096, 96
      %v2151 = vpop.permute.xlu0 %2150
      %2154 = vrot.lane.b32.xlu0 %v2100, 112
      %v2155 = vpop.permute.xlu0 %2154
      %v2157 = vsel %vm518, %v2005, %v2103
      %v2158 = vsel %vm520, %v2157, %v2107
      %v2159 = vsel %vm522, %v2158, %v2111
      %v2160 = vsel %vm524, %v2159, %v2115
      %v2161 = vsel %vm526, %v2160, %v2119
      %v2162 = vsel %vm528, %v2161, %v2123
      %v2163 = vsel %vm530, %v2162, %v2127
      %v2164 = vsel %vm518, %v2073, %v2131
      %v2165 = vsel %vm520, %v2164, %v2135
      %v2166 = vsel %vm522, %v2165, %v2139
      %v2167 = vsel %vm524, %v2166, %v2143
      %v2168 = vsel %vm526, %v2167, %v2147
      %v2169 = vsel %vm528, %v2168, %v2151
      %v2170 = vsel %vm530, %v2169, %v2155
      %2171 = vrot.lane.b32.xlu0 %v1709, 126
      %v2172 = vpop.permute.xlu0 %2171
      %2173 = vrot.lane.b32.xlu0 %v1711, 126
      %v2174 = vpop.permute.xlu0 %2173
      %2175 = vrot.lane.b32.xlu0 %v1714, 126
      %v2176 = vpop.permute.xlu0 %2175
      %2177 = vrot.lane.b32.xlu0 %v1716, 126
      %v2178 = vpop.permute.xlu0 %2177
      %2179 = vrot.lane.b32.xlu0 %v1719, 126
      %v2180 = vpop.permute.xlu0 %2179
      %2181 = vrot.lane.b32.xlu0 %v1721, 126
      %v2182 = vpop.permute.xlu0 %2181
      %2183 = vrot.lane.b32.xlu0 %v1724, 126
      %v2184 = vpop.permute.xlu0 %2183
      %2185 = vrot.lane.b32.xlu0 %v1726, 126
      %v2186 = vpop.permute.xlu0 %2185
      %v2195 = vcombine.low %v2172, %v2180
      %v2196 = vcombine.high %v2172, %v2180
      %v2198 = vunpack.c.l.s4 1983009808
      %v2199 = vunpack.c.0.s8 %v2198
      %v2200 = vlaneseq
      %v2201 = vshrl.u32 %v2200, 7
      %v2202 = vsub.s32 %v2199, %v2201
      %v2203 = vrot.slane %v2195, %v2202
      %v2205 = vunpack.c.l.s4 1983009808
      %v2206 = vunpack.c.0.s8 %v2205
      %v2207 = vlaneseq
      %v2208 = vshrl.u32 %v2207, 7
      %v2209 = vsub.s32 %v2206, %v2208
      %v2210 = vrot.slane %v2196, %v2209
      %v2211 = vcombine.low %v2176, %v2184
      %v2212 = vcombine.high %v2176, %v2184
      %v2214 = vunpack.c.l.s4 1983009808
      %v2215 = vunpack.c.0.s8 %v2214
      %v2216 = vlaneseq
      %v2217 = vshrl.u32 %v2216, 7
      %v2218 = vsub.s32 %v2215, %v2217
      %v2219 = vrot.slane %v2211, %v2218
      %v2221 = vunpack.c.l.s4 1983009808
      %v2222 = vunpack.c.0.s8 %v2221
      %v2223 = vlaneseq
      %v2224 = vshrl.u32 %v2223, 7
      %v2225 = vsub.s32 %v2222, %v2224
      %v2226 = vrot.slane %v2212, %v2225
      %v2227 = vcombine.low %v2203, %v2219
      %v2228 = vcombine.high %v2203, %v2219
      %v2230 = vunpack.c.l.s4 1934713408
      %v2231 = vunpack.c.0.s8 %v2230
      %v2232 = vlaneseq
      %v2233 = vshrl.u32 %v2232, 7
      %v2234 = vsub.s32 %v2231, %v2233
      %v2235 = vrot.slane %v2227, %v2234
      %v2237 = vunpack.c.l.s4 1934713408
      %v2238 = vunpack.c.0.s8 %v2237
      %v2239 = vlaneseq
      %v2240 = vshrl.u32 %v2239, 7
      %v2241 = vsub.s32 %v2238, %v2240
      %v2242 = vrot.slane %v2228, %v2241
      %v2243 = vcombine.low %v2210, %v2226
      %v2244 = vcombine.high %v2210, %v2226
      %v2246 = vunpack.c.l.s4 1934713408
      %v2247 = vunpack.c.0.s8 %v2246
      %v2248 = vlaneseq
      %v2249 = vshrl.u32 %v2248, 7
      %v2250 = vsub.s32 %v2247, %v2249
      %v2251 = vrot.slane %v2243, %v2250
      %v2253 = vunpack.c.l.s4 1934713408
      %v2254 = vunpack.c.0.s8 %v2253
      %v2255 = vlaneseq
      %v2256 = vshrl.u32 %v2255, 7
      %v2257 = vsub.s32 %v2254, %v2256
      %v2258 = vrot.slane %v2244, %v2257
      %v2259 = vcombine.high %v2235, 0.0
      %v2260 = vcombine.high %v2242, 0.0
      %v2261 = vcombine.high %v2251, 0.0
      %v2262 = vcombine.high %v2258, 0.0
      %v2263 = vcombine.low %v2174, %v2182
      %v2264 = vcombine.high %v2174, %v2182
      %v2266 = vunpack.c.l.s4 1983009808
      %v2267 = vunpack.c.0.s8 %v2266
      %v2268 = vlaneseq
      %v2269 = vshrl.u32 %v2268, 7
      %v2270 = vsub.s32 %v2267, %v2269
      %v2271 = vrot.slane %v2263, %v2270
      %v2273 = vunpack.c.l.s4 1983009808
      %v2274 = vunpack.c.0.s8 %v2273
      %v2275 = vlaneseq
      %v2276 = vshrl.u32 %v2275, 7
      %v2277 = vsub.s32 %v2274, %v2276
      %v2278 = vrot.slane %v2264, %v2277
      %v2279 = vcombine.low %v2178, %v2186
      %v2280 = vcombine.high %v2178, %v2186
      %v2282 = vunpack.c.l.s4 1983009808
      %v2283 = vunpack.c.0.s8 %v2282
      %v2284 = vlaneseq
      %v2285 = vshrl.u32 %v2284, 7
      %v2286 = vsub.s32 %v2283, %v2285
      %v2287 = vrot.slane %v2279, %v2286
      %v2289 = vunpack.c.l.s4 1983009808
      %v2290 = vunpack.c.0.s8 %v2289
      %v2291 = vlaneseq
      %v2292 = vshrl.u32 %v2291, 7
      %v2293 = vsub.s32 %v2290, %v2292
      %v2294 = vrot.slane %v2280, %v2293
      %v2295 = vcombine.low %v2271, %v2287
      %v2296 = vcombine.high %v2271, %v2287
      %v2298 = vunpack.c.l.s4 1934713408
      %v2299 = vunpack.c.0.s8 %v2298
      %v2300 = vlaneseq
      %v2301 = vshrl.u32 %v2300, 7
      %v2302 = vsub.s32 %v2299, %v2301
      %v2303 = vrot.slane %v2295, %v2302
      %v2305 = vunpack.c.l.s4 1934713408
      %v2306 = vunpack.c.0.s8 %v2305
      %v2307 = vlaneseq
      %v2308 = vshrl.u32 %v2307, 7
      %v2309 = vsub.s32 %v2306, %v2308
      %v2310 = vrot.slane %v2296, %v2309
      %v2311 = vcombine.low %v2278, %v2294
      %v2312 = vcombine.high %v2278, %v2294
      %v2314 = vunpack.c.l.s4 1934713408
      %v2315 = vunpack.c.0.s8 %v2314
      %v2316 = vlaneseq
      %v2317 = vshrl.u32 %v2316, 7
      %v2318 = vsub.s32 %v2315, %v2317
      %v2319 = vrot.slane %v2311, %v2318
      %v2321 = vunpack.c.l.s4 1934713408
      %v2322 = vunpack.c.0.s8 %v2321
      %v2323 = vlaneseq
      %v2324 = vshrl.u32 %v2323, 7
      %v2325 = vsub.s32 %v2322, %v2324
      %v2326 = vrot.slane %v2312, %v2325
      %v2327 = vcombine.high %v2303, 0.0
      %v2328 = vcombine.high %v2310, 0.0
      %v2329 = vcombine.high %v2319, 0.0
      %v2330 = vcombine.high %v2326, 0.0
      %2332 = vrot.lane.b32.xlu0 %v2259, 16
      %v2333 = vpop.permute.xlu0 %2332
      %2336 = vrot.lane.b32.xlu0 %v2242, 32
      %v2337 = vpop.permute.xlu0 %2336
      %2340 = vrot.lane.b32.xlu0 %v2260, 48
      %v2341 = vpop.permute.xlu0 %2340
      %2344 = vrot.lane.b32.xlu0 %v2251, 64
      %v2345 = vpop.permute.xlu0 %2344
      %2348 = vrot.lane.b32.xlu0 %v2261, 80
      %v2349 = vpop.permute.xlu0 %2348
      %2352 = vrot.lane.b32.xlu0 %v2258, 96
      %v2353 = vpop.permute.xlu0 %2352
      %2356 = vrot.lane.b32.xlu0 %v2262, 112
      %v2357 = vpop.permute.xlu0 %2356
      %2360 = vrot.lane.b32.xlu0 %v2327, 16
      %v2361 = vpop.permute.xlu0 %2360
      %2364 = vrot.lane.b32.xlu0 %v2310, 32
      %v2365 = vpop.permute.xlu0 %2364
      %2368 = vrot.lane.b32.xlu0 %v2328, 48
      %v2369 = vpop.permute.xlu0 %2368
      %2372 = vrot.lane.b32.xlu0 %v2319, 64
      %v2373 = vpop.permute.xlu0 %2372
      %2376 = vrot.lane.b32.xlu0 %v2329, 80
      %v2377 = vpop.permute.xlu0 %2376
      %2380 = vrot.lane.b32.xlu0 %v2326, 96
      %v2381 = vpop.permute.xlu0 %2380
      %2384 = vrot.lane.b32.xlu0 %v2330, 112
      %v2385 = vpop.permute.xlu0 %2384
      %v2387 = vsel %vm518, %v2235, %v2333
      %v2388 = vsel %vm520, %v2387, %v2337
      %v2389 = vsel %vm522, %v2388, %v2341
      %v2390 = vsel %vm524, %v2389, %v2345
      %v2391 = vsel %vm526, %v2390, %v2349
      %v2392 = vsel %vm528, %v2391, %v2353
      %v2393 = vsel %vm530, %v2392, %v2357
      %v2394 = vsel %vm518, %v2303, %v2361
      %v2395 = vsel %vm520, %v2394, %v2365
      %v2396 = vsel %vm522, %v2395, %v2369
      %v2397 = vsel %vm524, %v2396, %v2373
      %v2398 = vsel %vm526, %v2397, %v2377
      %v2399 = vsel %vm528, %v2398, %v2381
      %v2400 = vsel %vm530, %v2399, %v2385
      %v2403 = vrot.slane %v769, 4
      %v2404 = vrot.slane %v776, 4
      %v2409 = vrot.slane %v1238, 4
      %v2410 = vrot.slane %v1245, 4
      %v2415 = vrot.slane %v1698, 4
      %v2416 = vrot.slane %v1705, 4
      %v2421 = vrot.slane %v2163, 4
      %v2422 = vrot.slane %v2170, 4
      %vm2425 = vcmask 1043456
      %v2426 = vsel %vm2425, %v531, %v2403
      %v2427 = vsel %vm2425, %v538, %v2404
      %v2428 = vsel %vm2425, %v999, %v2409
      %v2429 = vsel %vm2425, %v1006, %v2410
      %v2430 = vsel %vm2425, %v1468, %v2415
      %v2431 = vsel %vm2425, %v1475, %v2416
      %v2432 = vsel %vm2425, %v1933, %v2421
      %v2433 = vsel %vm2425, %v1940, %v2422
      %v2434 = vld [vmem:[%s1] sm:$0xff]
      %v2435 = vld [vmem:[%s1 + $0x8] sm:$0xff]
      %v2436 = vld [vmem:[%s1 + $0x10] sm:$0xff]
      %v2437 = vld [vmem:[%s1 + $0x18] sm:$0xff]
      %v2438 = vld [vmem:[%s2] sm:$0xff]
      %v2439 = vld [vmem:[%s2 + $0x8] sm:$0xff]
      %v2440 = vld [vmem:[%s2 + $0x10] sm:$0xff]
      %v2441 = vld [vmem:[%s2 + $0x18] sm:$0xff]
      %2443 = vset.pattern.permute.xlu0 0
      %2444 = vperm.xlu0 %2443, %v2438
      %v2445 = vpop.permute.xlu0 %2444
      %2448 = vset.pattern.permute.xlu0 0
      %2449 = vperm.xlu0 %2448, %v2439
      %v2450 = vpop.permute.xlu0 %2449
      %2453 = vset.pattern.permute.xlu0 0
      %2454 = vperm.xlu0 %2453, %v2440
      %v2455 = vpop.permute.xlu0 %2454
      %2458 = vset.pattern.permute.xlu0 0
      %2459 = vperm.xlu0 %2458, %v2441
      %v2460 = vpop.permute.xlu0 %2459
      %vm2462 = vcmask 293888
      %v2464 = vsel %vm2462, %v2434, 0
      %v2467 = vsel %vm2462, %v2435, 0
      %v2470 = vsel %vm2462, %v2436, 0
      %v2473 = vsel %vm2462, %v2437, 0
      %v2476 = vsel %vm2425, %v2393, 0
      %v2479 = vsel %vm2425, %v2400, 0
      %2481 = vmatprep.subr.mxu0 %v2427
      %2482 = vmatpush1.msra.mxu0 %v2426
      %2483 = vmatprep.subr.mxu0 %v2429
      %2484 = vmatpush1.msra.mxu0 %v2428
      %2485 = vmatprep.subr.mxu0 %v2431
      %2486 = vmatpush1.msra.mxu0 %v2430
      %2487 = vmatprep.subr.mxu0 %v2433
      %2488 = vmatpush1.msra.mxu0 %v2432
      %2489 = vmatprep.subr.mxu0 %v2479
      %2490 = vmatpush1.msra.mxu0 %v2476
      %2491 = vmatprep.subr.mxu0 0.0
      %2492 = vmatpush1.msra.mxu0 0.0
      %2493 = vmatprep.subr.mxu0 0.0
      %2494 = vmatpush1.msra.mxu0 0.0
      %2495 = vmatprep.subr.mxu0 0.0
      %2496 = vmatpush1.msra.mxu0 0.0
      %2497 = vmatprep.subr.mxu0 0.0
      %2498 = vmatpush1.msra.mxu0 0.0
      %2499 = vmatprep.subr.mxu0 0.0
      %2500 = vmatpush1.msra.mxu0 0.0
      %2501 = vmatprep.subr.mxu0 0.0
      %2502 = vmatpush1.msra.mxu0 0.0
      %2503 = vmatprep.subr.mxu0 0.0
      %2504 = vmatpush1.msra.mxu0 0.0
      %2505 = vmatprep.subr.mxu0 0.0
      %2506 = vmatpush1.msra.mxu0 0.0
      %2507 = vmatprep.subr.mxu0 0.0
      %2508 = vmatpush1.msra.mxu0 0.0
      %2509 = vmatprep.subr.mxu0 0.0
      %2510 = vmatpush1.msra.mxu0 0.0
      %2511 = vmatprep.subr.mxu0 0.0
      %2512 = vmatpush1.msra.mxu0 0.0
      %2513 = vmatprep.subr.mxu0 0.0
      %2514 = vmatpush1.msra.mxu0 0.0
      %2515 = vmatprep.subr.mxu0 0.0
      %2516 = vmatpush1.msra.mxu0 0.0
      %2517 = vmatprep.subr.mxu0 0.0
      %2518 = vmatpush1.msra.mxu0 0.0
      %2519 = vmatprep.subr.mxu0 0.0
      %2520 = vmatpush1.msra.mxu0 0.0
      %2521 = vmatprep.subr.mxu0 0.0
      %2522 = vmatpush1.msra.mxu0 0.0
      %2523 = vmatprep.subr.mxu0 0.0
      %2524 = vmatpush1.msra.mxu0 0.0
      %2525 = vmatprep.subr.mxu0 0.0
      %2526 = vmatpush1.msra.mxu0 0.0
      %2527 = vmatprep.subr.mxu0 0.0
      %2528 = vmatpush1.msra.mxu0 0.0
      %2529 = vmatprep.subr.mxu0 0.0
      %2530 = vmatpush1.msra.mxu0 0.0
      %2531 = vmatprep.subr.mxu0 0.0
      %2532 = vmatpush1.msra.mxu0 0.0
      %2533 = vmatprep.subr.mxu0 0.0
      %2534 = vmatpush1.msra.mxu0 0.0
      %2535 = vmatprep.subr.mxu0 0.0
      %2536 = vmatpush1.msra.mxu0 0.0
      %2537 = vmatprep.subr.mxu0 0.0
      %2538 = vmatpush1.msra.mxu0 0.0
      %2539 = vmatprep.subr.mxu0 0.0
      %2540 = vmatpush1.msra.mxu0 0.0
      %2541 = vmatprep.subr.mxu0 0.0
      %2542 = vmatpush1.msra.mxu0 0.0
      %2543 = vmatprep.subr.mxu0 0.0
      %2544 = vmatpush1.msra.mxu0 0.0
      %2545 = vmatprep.mubr.f32.mxu0 0.0
      %2546 = vmatmul.mubr.f32.gmra.mrb[0].mxu0 %v2464
      %v2547 = vpop.f32.mrb[0].mxu0
      %v2548 = vadd.f32 %v2445, %v2547
      %v2549 = vpop.f32.mrb[0].mxu0
      %v2550 = vadd.f32 %v2445, %v2549
      %2551 = vmatprep.mubr.f32.mxu0 0.0
      %2552 = vmatmul.mubr.f32.gmra.mrb[0].mxu0 %v2467
      %v2553 = vpop.f32.mrb[0].mxu0
      %v2554 = vadd.f32 %v2450, %v2553
      %v2555 = vpop.f32.mrb[0].mxu0
      %v2556 = vadd.f32 %v2450, %v2555
      %2557 = vmatprep.mubr.f32.mxu0 0.0
      %2558 = vmatmul.mubr.f32.gmra.mrb[0].mxu0 %v2470
      %v2559 = vpop.f32.mrb[0].mxu0
      %v2560 = vadd.f32 %v2455, %v2559
      %v2561 = vpop.f32.mrb[0].mxu0
      %v2562 = vadd.f32 %v2455, %v2561
      %2563 = vmatprep.mubr.f32.mxu0 0.0
      %2564 = vmatmul.mubr.f32.gmra.mrb[0].mxu0 %v2473
      %v2565 = vpop.f32.mrb[0].mxu0
      %v2566 = vadd.f32 %v2460, %v2565
      %v2567 = vpop.f32.mrb[0].mxu0
      %v2568 = vadd.f32 %v2460, %v2567
      %2569 = vdwg.mxu0
      %2570 = vst [vmem:[%s205] sm:$0xff] %v2548
      %2571 = vst [vmem:[%s205 + $0x8] sm:$0xff] %v2550
      %2572 = vst [vmem:[%s205 + $0x10] sm:$0xff] %v2554
      %2573 = vst [vmem:[%s205 + $0x18] sm:$0xff] %v2556
      %2574 = vst [vmem:[%s205 + $0x20] sm:$0xff] %v2560
      %2575 = vst [vmem:[%s205 + $0x28] sm:$0xff] %v2562
      %2576 = vst [vmem:[%s205 + $0x30] sm:$0xff] %v2566
      %2577 = vst [vmem:[%s205 + $0x38] sm:$0xff] %v2568
      %v2578 = vadd.f32 %v2548, %v2550
      %2579 = vadd.xlane.f32.xlu0 %v2578
      %v2580 = vpop.xlane.xlu0 %2579
      %v2581 = vadd.f32 %v2554, %v2556
      %2582 = vadd.xlane.f32.xlu0 %v2581
      %v2583 = vpop.xlane.xlu0 %2582
      %v2584 = vadd.f32 %v2560, %v2562
      %2585 = vadd.xlane.f32.xlu0 %v2584
      %v2586 = vpop.xlane.xlu0 %2585
      %v2587 = vadd.f32 %v2566, %v2568
      %2588 = vadd.xlane.f32.xlu0 %v2587
      %v2589 = vpop.xlane.xlu0 %2588
      %v2590 = vmul.f32 %v2548, %v2548
      %v2591 = vmul.f32 %v2550, %v2550
      %v2592 = vmul.f32 %v2554, %v2554
      %v2593 = vmul.f32 %v2556, %v2556
      %v2594 = vmul.f32 %v2560, %v2560
      %v2595 = vmul.f32 %v2562, %v2562
      %v2596 = vmul.f32 %v2566, %v2566
      %v2597 = vmul.f32 %v2568, %v2568
      %v2598 = vadd.f32 %v2590, %v2591
      %2599 = vadd.xlane.f32.xlu0 %v2598
      %v2600 = vpop.xlane.xlu0 %2599
      %v2601 = vadd.f32 %v2592, %v2593
      %2602 = vadd.xlane.f32.xlu0 %v2601
      %v2603 = vpop.xlane.xlu0 %2602
      %v2604 = vadd.f32 %v2594, %v2595
      %2605 = vadd.xlane.f32.xlu0 %v2604
      %v2606 = vpop.xlane.xlu0 %2605
      %v2607 = vadd.f32 %v2596, %v2597
      %2608 = vadd.xlane.f32.xlu0 %v2607
      %v2609 = vpop.xlane.xlu0 %2608
      %v2610 = vsel %vm300, %v2580, %v2600
      %v2611 = vsel %vm300, %v2583, %v2603
      %v2612 = vsel %vm300, %v2586, %v2606
      %v2613 = vsel %vm300, %v2589, %v2609
      %vm2614 = vcmask 15360
      %2615 = vst.msk [vmem:[%s210] sm:$0xff] %vm2614, %v2610
      %2616 = vst.msk [vmem:[%s210 + $0x8] sm:$0xff] %vm2614, %v2611
      %2617 = vst.msk [vmem:[%s210 + $0x10] sm:$0xff] %vm2614, %v2612
      %2618 = vst.msk [vmem:[%s210 + $0x18] sm:$0xff] %vm2614, %v2613
      %p2619 = scmp.lt.s32.totalorder %s16, 1
      %s2620 = scalar_select %p2619, %s16, 1
      %s2621 = smul.addr %s2620, 8
      %s2622 = smul.addr %s2621, 8
      %s2623 = scalar_lea.vmem %s3, %s2622
      %p2624 = scmp.lt.s32.totalorder %s16, 1
      %s2625 = scalar_select %p2624, %s16, 1
      %s2626 = smul.addr %s2625, 4
      %s2627 = smul.addr %s2626, 8
      %s2628 = scalar_lea.vmem %s4, %s2627
      // Predicated region
      $region33: #{up_conv_forward.2} parent=31 // pred_check
        %p2629 = pneg %p102
      $region34: #{up_conv_forward.2} parent=31 // pred_check_branch
        %2631 = sbr.rel (%p2629) target = $region36
      $region35: #{up_conv_forward.2} parent=31 // pred_region
        _
      $region36: #{up_conv_forward.2} parent=31 // pred_fallthru
        _
      // Predicated region
      $region37: #{up_conv_forward.2} parent=31 // pred_check
        %p2632 = pneg %p128
      $region38: #{up_conv_forward.2} parent=31 // pred_check_branch
        %2634 = sbr.rel (%p2632) target = $region40
      $region39: #{up_conv_forward.2} parent=31 // pred_region
        _
      $region40: #{up_conv_forward.2} parent=31 // pred_fallthru
        _
    $region32: #{up_conv_forward.2} parent=5 // pred_fallthru
      _
    %p2635 = scmp.le.s32.totalorder 2, %s11
    // Predicated region
    $region41: #{up_conv_forward.2} parent=5 // pred_check
      %p2636 = pneg %p2635
    $region42: #{up_conv_forward.2} parent=5 // pred_check_branch
      %2638 = sbr.rel (%p2636) target = $region44
    $region43: #{up_conv_forward.2} parent=5 // pred_region
      %s2639 = ssub.s32 %s11, 2
      // Predicated region
      $region45: #{up_conv_forward.2} parent=43 // pred_check
        %p2640 = pneg %p108
      $region46: #{up_conv_forward.2} parent=43 // pred_check_branch
        %2642 = sbr.rel (%p2640) target = $region48
      $region47: #{up_conv_forward.2} parent=43 // pred_region
        %p2643 = scmp.lt.s32.totalorder %s17, 1
        %s2644 = scalar_select %p2643, %s17, 1
        %s2645 = smul.addr %s2644, 8
        %s2646 = smul.addr %s2645, 8
        %s2647 = scalar_lea.vmem %s3, %s2646
      $region48: #{up_conv_forward.2} parent=43 // pred_fallthru
        _
      // Predicated region
      $region49: #{up_conv_forward.2} parent=43 // pred_check
        %p2648 = pneg %p134
      $region50: #{up_conv_forward.2} parent=43 // pred_check_branch
        %2650 = sbr.rel (%p2648) target = $region52
      $region51: #{up_conv_forward.2} parent=43 // pred_region
        %p2651 = scmp.lt.s32.totalorder %s17, 1
        %s2652 = scalar_select %p2651, %s17, 1
        %s2653 = smul.addr %s2652, 4
        %s2654 = smul.addr %s2653, 8
        %s2655 = scalar_lea.vmem %s4, %s2654
      $region52: #{up_conv_forward.2} parent=43 // pred_fallthru
        _
    $region44: #{up_conv_forward.2} parent=5 // pred_fallthru
      _
  $region6: #{up_conv_forward.2} parent=0 // loop_footer
    %s15 = sadd.s32 1, %s11
  $region7: #{up_conv_forward.2} parent=0 // loop_footer_branch
    %10 = sbr.rel target = $region3
  $region8: #{up_conv_forward.2} parent=0 // loop_exit
    _

</llo_original>
